<compile_context>
chip_gen: v6e
topology: v6e:2x2x1
jax: 0.10.0
libtpu: 0.0.40
codegen_flags: <defaults>
</compile_context>

<pallas_src>
import functools
import math

import jax
import jax.numpy as jnp
from jax import lax
from jax.experimental import pallas as pl
from jax.experimental.pallas import tpu as pltpu

_LN_EPS = 1e-5  # torch.nn.LayerNorm default
_SQRT_2_OVER_PI = math.sqrt(2.0 / math.pi)


def _layer_norm(v, g, b):
    mu = jnp.mean(v, axis=-1, keepdims=True)
    c = v - mu
    var = jnp.mean(c * c, axis=-1, keepdims=True)
    return c * lax.rsqrt(var + _LN_EPS) * g + b


# TODO(synk): PyTorch F.gelu defaults to the exact erf-based GELU; erf has no
# guaranteed Mosaic lowering, so the tanh approximation (== F.gelu(approximate='tanh'))
# is used in BOTH the kernel and the in-script reference.
def _gelu_tanh(v):
    return 0.5 * v * (1.0 + jnp.tanh(_SQRT_2_OVER_PI * (v + 0.044715 * v * v * v)))


def _encoder_layer_kernel(
    x_ref,
    g1_ref, be1_ref,
    wq_ref, bq_ref, wk_ref, bk_ref, wv_ref, bv_ref,
    wo_ref, bo_ref,
    g2_ref, be2_ref,
    w1_ref, bf1_ref, w2_ref, bf2_ref,
    o_ref,
    *, num_heads: int,
):
    Bt, S, D = x_ref.shape
    hd = D // num_heads
    inv_scale = 1.0 / math.sqrt(hd)

    # Weight blocks use constant index_maps -> resident in VMEM across the grid.
    g1, be1 = g1_ref[...], be1_ref[...]
    g2, be2 = g2_ref[...], be2_ref[...]
    wq, bq = wq_ref[...], bq_ref[...]
    wk, bk = wk_ref[...], bk_ref[...]
    wv, bv = wv_ref[...], bv_ref[...]
    wo, bo = wo_ref[...], bo_ref[...]
    w1, bf1 = w1_ref[...], bf1_ref[...]
    w2, bf2 = w2_ref[...], bf2_ref[...]

    for bt in range(Bt):  # static unroll over batch rows folded into this block
        x = x_ref[bt].astype(jnp.float32)  # (S, D)

        # ---- Multi-head self-attention on LN1(x) ----
        h = _layer_norm(x, g1, be1)
        q = jnp.dot(h, wq, preferred_element_type=jnp.float32) + bq
        k = jnp.dot(h, wk, preferred_element_type=jnp.float32) + bk
        v = jnp.dot(h, wv, preferred_element_type=jnp.float32) + bv

        # out_proj(concat_h(head_h)) == sum_h head_h @ Wo[h*hd:(h+1)*hd, :] + bo,
        # which avoids an in-kernel concatenate / relayout.
        attn = None
        for hh in range(num_heads):  # static unroll over heads
            lo, hi = hh * hd, (hh + 1) * hd
            qh, kh, vh = q[:, lo:hi], k[:, lo:hi], v[:, lo:hi]
            # q @ k^T via dot_general (no materialized transpose)
            s = lax.dot_general(
                qh, kh, (((1,), (1,)), ((), ())),
                preferred_element_type=jnp.float32,
            ) * inv_scale
            s = s - jnp.max(s, axis=-1, keepdims=True)
            e = jnp.exp(s)
            probs = e / jnp.sum(e, axis=-1, keepdims=True)
            head = jnp.dot(probs, vh, preferred_element_type=jnp.float32)      # (S, hd)
            proj = jnp.dot(head, wo[lo:hi, :], preferred_element_type=jnp.float32)
            attn = proj if attn is None else attn + proj
        attn = attn + bo

        # TODO(synk): dropout (p=0.1) is identity here (inference semantics);
        # training-mode dropout would need pltpu.prng_seed / prng_random_bits.
        x1 = x + attn  # residual 1

        # ---- Position-wise feed-forward on LN2(x1) ----
        h2 = _layer_norm(x1, g2, be2)
        f = jnp.dot(h2, w1, preferred_element_type=jnp.float32) + bf1
        f = _gelu_tanh(f)
        f = jnp.dot(f, w2, preferred_element_type=jnp.float32) + bf2

        o_ref[bt] = (x1 + f).astype(o_ref.dtype)  # residual 2


def transformer_encoder_layer(x, params, *, num_heads: int, batch_block: int = 1):
    """Forward pass of the Transformer encoder layer. x: (B, S, D)."""
    B, S, D = x.shape
    assert D % num_heads == 0, "d_model must be divisible by num_heads"
    assert B % batch_block == 0, "batch must be divisible by batch_block"
    f32 = jnp.float32

    def row(v):  # (N,) -> (1, N): 2-D, lane-major layout for vector params
        return jnp.asarray(v, f32).reshape(1, -1)

    wqkv = jnp.asarray(params["wqkv"], f32)  # (D, 3D)   (x @ W convention)
    bqkv = jnp.asarray(params["bqkv"], f32)  # (3D,)
    wq, wk, wv = wqkv[:, :D], wqkv[:, D:2 * D], wqkv[:, 2 * D:]
    bq, bk, bv = bqkv[:D], bqkv[D:2 * D], bqkv[2 * D:]

    weights = [
        row(params["g1"]), row(params["b1"]),
        wq, row(bq), wk, row(bk), wv, row(bv),
        jnp.asarray(params["wo"], f32), row(params["bo"]),
        row(params["g2"]), row(params["b2"]),
        jnp.asarray(params["w1"], f32), row(params["bf1"]),
        jnp.asarray(params["w2"], f32), row(params["bf2"]),
    ]

    # Full-array blocks + constant index map: DMA'd once, then resident in VMEM
    # across every batch grid step (no per-step recompute / re-fetch).
    weight_specs = [pl.BlockSpec(w.shape, lambda b: (0, 0)) for w in weights]

    grid_spec = pltpu.PrefetchScalarGridSpec(
        num_scalar_prefetch=0,
        grid=(B // batch_block,),
        in_specs=[pl.BlockSpec((batch_block, S, D), lambda b: (b, 0, 0))]
        + weight_specs,
        out_specs=pl.BlockSpec((batch_block, S, D), lambda b: (b, 0, 0)),
    )

    kernel = functools.partial(_encoder_layer_kernel, num_heads=num_heads)
    return pl.pallas_call(
        kernel,
        out_shape=jax.ShapeDtypeStruct((B, S, D), x.dtype),
        grid_spec=grid_spec,
        compiler_params=pltpu.CompilerParams(
            dimension_semantics=("parallel",),  # batch steps shard across TCs (v7x)
        ),
    )(x, *weights)


def _reference_encoder_layer(x, p, num_heads):
    """Pure-JAX mirror of the PyTorch TransformerEncoderLayer forward (eval mode)."""
    B, S, D = x.shape
    hd = D // num_heads
    hi = lax.Precision.HIGHEST

    def mm(a, b):
        return jnp.matmul(a, b, precision=hi)

    def ln(v, g, b):
        mu = v.mean(-1, keepdims=True)
        var = ((v - mu) ** 2).mean(-1, keepdims=True)
        return (v - mu) * lax.rsqrt(var + _LN_EPS) * g + b

    h = ln(x, p["g1"], p["b1"])
    qkv = mm(h, p["wqkv"]) + p["bqkv"]
    q, k, v = jnp.split(qkv, 3, axis=-1)
    to_heads = lambda t: t.reshape(B, S, num_heads, hd).transpose(0, 2, 1, 3)
    q, k, v = to_heads(q), to_heads(k), to_heads(v)
    scores = mm(q, k.transpose(0, 1, 3, 2)) / math.sqrt(hd)
    probs = jax.nn.softmax(scores, axis=-1)
    attn = mm(probs, v).transpose(0, 2, 1, 3).reshape(B, S, D)
    attn = mm(attn, p["wo"]) + p["bo"]
    x1 = x + attn
    h2 = ln(x1, p["g2"], p["b2"])
    f = mm(_gelu_tanh(mm(h2, p["w1"]) + p["bf1"]), p["w2"]) + p["bf2"]
    return x1 + f


if __name__ == "__main__":
    B, S, D, H, F = 2, 8, 32, 4, 64  # batch, seq, d_model, num_heads, d_ff
    key = jax.random.PRNGKey(0)
    ks = jax.random.split(key, 10)

    def init(k, shape, scale):
        return scale * jax.random.normal(k, shape, dtype=jnp.float32)

    params = {
        "g1": 1.0 + init(ks[0], (D,), 0.05),
        "b1": init(ks[1], (D,), 0.05),
        "wqkv": init(ks[2], (D, 3 * D), 0.2),
        "bqkv": init(ks[3], (3 * D,), 0.1),
        "wo": init(ks[4], (D, D), 0.2),
        "bo": init(ks[5], (D,), 0.1),
        "g2": 1.0 + init(ks[6], (D,), 0.05),
        "b2": init(ks[7], (D,), 0.05),
        "w1": init(ks[8], (D, F), 0.2),
        "bf1": init(ks[9], (F,), 0.1),
        "w2": init(jax.random.fold_in(key, 11), (F, D), 0.2),
        "bf2": init(jax.random.fold_in(key, 12), (D,), 0.1),
    }
    x = jax.random.normal(jax.random.fold_in(key, 13), (B, S, D), dtype=jnp.float32)

    ref = _reference_encoder_layer(x, params, H)

    for bb in (1, B):  # per-batch grid (megacore-parallel) and fully folded batch
        out = jax.block_until_ready(
            transformer_encoder_layer(x, params, num_heads=H, batch_block=bb)
        )
        assert out.shape == x.shape and out.dtype == x.dtype
        err = float(jnp.max(jnp.abs(out - ref)))
        assert err < 1e-4, f"batch_block={bb}: max abs err {err} vs reference"

    print("KERNEL_OK")
</pallas_src>

<mosaic_0001>
module attributes {stable_mosaic.version = 11 : i64} {
  func.func @_encoder_layer_kernel(%arg0: i32, %arg1: memref<1x8x32xf32, #tpu.memory_space<vmem>>, %arg2: memref<1x32xf32, #tpu.memory_space<vmem>>, %arg3: memref<1x32xf32, #tpu.memory_space<vmem>>, %arg4: memref<32x32xf32, #tpu.memory_space<vmem>>, %arg5: memref<1x32xf32, #tpu.memory_space<vmem>>, %arg6: memref<32x32xf32, #tpu.memory_space<vmem>>, %arg7: memref<1x32xf32, #tpu.memory_space<vmem>>, %arg8: memref<32x32xf32, #tpu.memory_space<vmem>>, %arg9: memref<1x32xf32, #tpu.memory_space<vmem>>, %arg10: memref<32x32xf32, #tpu.memory_space<vmem>>, %arg11: memref<1x32xf32, #tpu.memory_space<vmem>>, %arg12: memref<1x32xf32, #tpu.memory_space<vmem>>, %arg13: memref<1x32xf32, #tpu.memory_space<vmem>>, %arg14: memref<32x64xf32, #tpu.memory_space<vmem>>, %arg15: memref<1x64xf32, #tpu.memory_space<vmem>>, %arg16: memref<64x32xf32, #tpu.memory_space<vmem>>, %arg17: memref<1x32xf32, #tpu.memory_space<vmem>>, %arg18: memref<1x8x32xf32, #tpu.memory_space<vmem>>) attributes {dimension_semantics = [#tpu.dimension_semantics<parallel>], iteration_bounds = array<i64: 2>, scalar_prefetch = 0 : i64, scratch_operands = 0 : i64, tpu.core_type = #tpu.core_type<tc>, window_params = [{transform_indices = @transform_0, window_bounds = array<i64: 1, 8, 32>}, {pipeline_mode = #tpu.pipeline_mode<synchronous>, transform_indices = @transform_1, window_bounds = array<i64: 1, 32>}, {pipeline_mode = #tpu.pipeline_mode<synchronous>, transform_indices = @transform_2, window_bounds = array<i64: 1, 32>}, {pipeline_mode = #tpu.pipeline_mode<synchronous>, transform_indices = @transform_3, window_bounds = array<i64: 32, 32>}, {pipeline_mode = #tpu.pipeline_mode<synchronous>, transform_indices = @transform_4, window_bounds = array<i64: 1, 32>}, {pipeline_mode = #tpu.pipeline_mode<synchronous>, transform_indices = @transform_5, window_bounds = array<i64: 32, 32>}, {pipeline_mode = #tpu.pipeline_mode<synchronous>, transform_indices = @transform_6, window_bounds = array<i64: 1, 32>}, {pipeline_mode = #tpu.pipeline_mode<synchronous>, transform_indices = @transform_7, window_bounds = array<i64: 32, 32>}, {pipeline_mode = #tpu.pipeline_mode<synchronous>, transform_indices = @transform_8, window_bounds = array<i64: 1, 32>}, {pipeline_mode = #tpu.pipeline_mode<synchronous>, transform_indices = @transform_9, window_bounds = array<i64: 32, 32>}, {pipeline_mode = #tpu.pipeline_mode<synchronous>, transform_indices = @transform_10, window_bounds = array<i64: 1, 32>}, {pipeline_mode = #tpu.pipeline_mode<synchronous>, transform_indices = @transform_11, window_bounds = array<i64: 1, 32>}, {pipeline_mode = #tpu.pipeline_mode<synchronous>, transform_indices = @transform_12, window_bounds = array<i64: 1, 32>}, {pipeline_mode = #tpu.pipeline_mode<synchronous>, transform_indices = @transform_13, window_bounds = array<i64: 32, 64>}, {pipeline_mode = #tpu.pipeline_mode<synchronous>, transform_indices = @transform_14, window_bounds = array<i64: 1, 64>}, {pipeline_mode = #tpu.pipeline_mode<synchronous>, transform_indices = @transform_15, window_bounds = array<i64: 64, 32>}, {pipeline_mode = #tpu.pipeline_mode<synchronous>, transform_indices = @transform_16, window_bounds = array<i64: 1, 32>}, {transform_indices = @transform_17, window_bounds = array<i64: 1, 8, 32>}]} {
    %c0 = arith.constant 0 : index
    %c0_0 = arith.constant 0 : index
    %0 = vector.load %arg2[%c0, %c0_0] : memref<1x32xf32, #tpu.memory_space<vmem>>, vector<1x32xf32>
    %c0_1 = arith.constant 0 : index
    %c0_2 = arith.constant 0 : index
    %1 = vector.load %arg3[%c0_1, %c0_2] : memref<1x32xf32, #tpu.memory_space<vmem>>, vector<1x32xf32>
    %c0_3 = arith.constant 0 : index
    %c0_4 = arith.constant 0 : index
    %2 = vector.load %arg12[%c0_3, %c0_4] : memref<1x32xf32, #tpu.memory_space<vmem>>, vector<1x32xf32>
    %c0_5 = arith.constant 0 : index
    %c0_6 = arith.constant 0 : index
    %3 = vector.load %arg13[%c0_5, %c0_6] : memref<1x32xf32, #tpu.memory_space<vmem>>, vector<1x32xf32>
    %c0_7 = arith.constant 0 : index
    %c0_8 = arith.constant 0 : index
    %4 = vector.load %arg4[%c0_7, %c0_8] : memref<32x32xf32, #tpu.memory_space<vmem>>, vector<32x32xf32>
    %c0_9 = arith.constant 0 : index
    %c0_10 = arith.constant 0 : index
    %5 = vector.load %arg5[%c0_9, %c0_10] : memref<1x32xf32, #tpu.memory_space<vmem>>, vector<1x32xf32>
    %c0_11 = arith.constant 0 : index
    %c0_12 = arith.constant 0 : index
    %6 = vector.load %arg6[%c0_11, %c0_12] : memref<32x32xf32, #tpu.memory_space<vmem>>, vector<32x32xf32>
    %c0_13 = arith.constant 0 : index
    %c0_14 = arith.constant 0 : index
    %7 = vector.load %arg7[%c0_13, %c0_14] : memref<1x32xf32, #tpu.memory_space<vmem>>, vector<1x32xf32>
    %c0_15 = arith.constant 0 : index
    %c0_16 = arith.constant 0 : index
    %8 = vector.load %arg8[%c0_15, %c0_16] : memref<32x32xf32, #tpu.memory_space<vmem>>, vector<32x32xf32>
    %c0_17 = arith.constant 0 : index
    %c0_18 = arith.constant 0 : index
    %9 = vector.load %arg9[%c0_17, %c0_18] : memref<1x32xf32, #tpu.memory_space<vmem>>, vector<1x32xf32>
    %c0_19 = arith.constant 0 : index
    %c0_20 = arith.constant 0 : index
    %10 = vector.load %arg10[%c0_19, %c0_20] : memref<32x32xf32, #tpu.memory_space<vmem>>, vector<32x32xf32>
    %c0_21 = arith.constant 0 : index
    %c0_22 = arith.constant 0 : index
    %11 = vector.load %arg11[%c0_21, %c0_22] : memref<1x32xf32, #tpu.memory_space<vmem>>, vector<1x32xf32>
    %c0_23 = arith.constant 0 : index
    %c0_24 = arith.constant 0 : index
    %12 = vector.load %arg14[%c0_23, %c0_24] : memref<32x64xf32, #tpu.memory_space<vmem>>, vector<32x64xf32>
    %c0_25 = arith.constant 0 : index
    %c0_26 = arith.constant 0 : index
    %13 = vector.load %arg15[%c0_25, %c0_26] : memref<1x64xf32, #tpu.memory_space<vmem>>, vector<1x64xf32>
    %c0_27 = arith.constant 0 : index
    %c0_28 = arith.constant 0 : index
    %14 = vector.load %arg16[%c0_27, %c0_28] : memref<64x32xf32, #tpu.memory_space<vmem>>, vector<64x32xf32>
    %c0_29 = arith.constant 0 : index
    %c0_30 = arith.constant 0 : index
    %15 = vector.load %arg17[%c0_29, %c0_30] : memref<1x32xf32, #tpu.memory_space<vmem>>, vector<1x32xf32>
    %c0_31 = arith.constant 0 : index
    %c0_32 = arith.constant 0 : index
    %c0_33 = arith.constant 0 : index
    %16 = vector.load %arg1[%c0_31, %c0_32, %c0_33] : memref<1x8x32xf32, #tpu.memory_space<vmem>>, vector<1x8x32xf32>
    %17 = vector.shape_cast %16 : vector<1x8x32xf32> to vector<8x32xf32>
    %cst = arith.constant dense<0.000000e+00> : vector<8xf32>
    %18 = vector.multi_reduction <add>, %17, %cst [1] : vector<8x32xf32> to vector<8xf32>
    %19 = vector.shape_cast %18 : vector<8xf32> to vector<8x1xf32>
    %cst_34 = arith.constant 3.200000e+01 : f32
    %20 = vector.broadcast %cst_34 : f32 to vector<8x1xf32>
    %21 = arith.divf %19, %20 : vector<8x1xf32>
    %22 = vector.broadcast %21 : vector<8x1xf32> to vector<8x32xf32>
    %23 = arith.subf %17, %22 : vector<8x32xf32>
    %24 = arith.mulf %23, %23 : vector<8x32xf32>
    %cst_35 = arith.constant dense<0.000000e+00> : vector<8xf32>
    %25 = vector.multi_reduction <add>, %24, %cst_35 [1] : vector<8x32xf32> to vector<8xf32>
    %26 = vector.shape_cast %25 : vector<8xf32> to vector<8x1xf32>
    %cst_36 = arith.constant 3.200000e+01 : f32
    %27 = vector.broadcast %cst_36 : f32 to vector<8x1xf32>
    %28 = arith.divf %26, %27 : vector<8x1xf32>
    %cst_37 = arith.constant 9.99999974E-6 : f32
    %29 = vector.broadcast %cst_37 : f32 to vector<8x1xf32>
    %30 = arith.addf %28, %29 : vector<8x1xf32>
    %31 = math.rsqrt %30 : vector<8x1xf32>
    %32 = vector.broadcast %31 : vector<8x1xf32> to vector<8x32xf32>
    %33 = arith.mulf %23, %32 : vector<8x32xf32>
    %34 = vector.broadcast %0 : vector<1x32xf32> to vector<8x32xf32>
    %35 = arith.mulf %33, %34 : vector<8x32xf32>
    %36 = vector.broadcast %1 : vector<1x32xf32> to vector<8x32xf32>
    %37 = arith.addf %35, %36 : vector<8x32xf32>
    %cst_38 = arith.constant dense<0.000000e+00> : vector<8x32xf32>
    %38 = tpu.matmul %37, %4, %cst_38 {dimension_numbers = #tpu.dot_dimension_numbers<[1], [0], [0], [1], [0, 0, 1, 1], [], []>} : vector<8x32xf32>, vector<32x32xf32>, vector<8x32xf32> -> vector<8x32xf32>
    %39 = vector.broadcast %5 : vector<1x32xf32> to vector<8x32xf32>
    %40 = arith.addf %38, %39 : vector<8x32xf32>
    %cst_39 = arith.constant dense<0.000000e+00> : vector<8x32xf32>
    %41 = tpu.matmul %37, %6, %cst_39 {dimension_numbers = #tpu.dot_dimension_numbers<[1], [0], [0], [1], [0, 0, 1, 1], [], []>} : vector<8x32xf32>, vector<32x32xf32>, vector<8x32xf32> -> vector<8x32xf32>
    %42 = vector.broadcast %7 : vector<1x32xf32> to vector<8x32xf32>
    %43 = arith.addf %41, %42 : vector<8x32xf32>
    %cst_40 = arith.constant dense<0.000000e+00> : vector<8x32xf32>
    %44 = tpu.matmul %37, %8, %cst_40 {dimension_numbers = #tpu.dot_dimension_numbers<[1], [0], [0], [1], [0, 0, 1, 1], [], []>} : vector<8x32xf32>, vector<32x32xf32>, vector<8x32xf32> -> vector<8x32xf32>
    %45 = vector.broadcast %9 : vector<1x32xf32> to vector<8x32xf32>
    %46 = arith.addf %44, %45 : vector<8x32xf32>
    %47 = vector.extract_strided_slice %40 {offsets = [0, 0], sizes = [8, 8], strides = [1, 1]} : vector<8x32xf32> to vector<8x8xf32>
    %48 = vector.extract_strided_slice %43 {offsets = [0, 0], sizes = [8, 8], strides = [1, 1]} : vector<8x32xf32> to vector<8x8xf32>
    %49 = vector.extract_strided_slice %46 {offsets = [0, 0], sizes = [8, 8], strides = [1, 1]} : vector<8x32xf32> to vector<8x8xf32>
    %cst_41 = arith.constant dense<0.000000e+00> : vector<8x8xf32>
    %50 = tpu.matmul %47, %48, %cst_41 {dimension_numbers = #tpu.dot_dimension_numbers<[1], [1], [0], [0], [0, 0, 1, 0], [], []>} : vector<8x8xf32>, vector<8x8xf32>, vector<8x8xf32> -> vector<8x8xf32>
    %cst_42 = arith.constant 0.353553385 : f32
    %51 = vector.broadcast %cst_42 : f32 to vector<8x8xf32>
    %52 = arith.mulf %50, %51 : vector<8x8xf32>
    %cst_43 = arith.constant dense<0xFF800000> : vector<8xf32>
    %53 = vector.multi_reduction <maximumf>, %52, %cst_43 [1] : vector<8x8xf32> to vector<8xf32>
    %54 = vector.shape_cast %53 : vector<8xf32> to vector<8x1xf32>
    %55 = vector.broadcast %54 : vector<8x1xf32> to vector<8x8xf32>
    %56 = arith.subf %52, %55 : vector<8x8xf32>
    %57 = math.exp %56 : vector<8x8xf32>
    %cst_44 = arith.constant dense<0.000000e+00> : vector<8xf32>
    %58 = vector.multi_reduction <add>, %57, %cst_44 [1] : vector<8x8xf32> to vector<8xf32>
    %59 = vector.shape_cast %58 : vector<8xf32> to vector<8x1xf32>
    %60 = vector.broadcast %59 : vector<8x1xf32> to vector<8x8xf32>
    %61 = arith.divf %57, %60 : vector<8x8xf32>
    %cst_45 = arith.constant dense<0.000000e+00> : vector<8x8xf32>
    %62 = tpu.matmul %61, %49, %cst_45 {dimension_numbers = #tpu.dot_dimension_numbers<[1], [0], [0], [1], [0, 0, 1, 1], [], []>} : vector<8x8xf32>, vector<8x8xf32>, vector<8x8xf32> -> vector<8x8xf32>
    %63 = vector.extract_strided_slice %10 {offsets = [0, 0], sizes = [8, 32], strides = [1, 1]} : vector<32x32xf32> to vector<8x32xf32>
    %cst_46 = arith.constant dense<0.000000e+00> : vector<8x32xf32>
    %64 = tpu.matmul %62, %63, %cst_46 {dimension_numbers = #tpu.dot_dimension_numbers<[1], [0], [0], [1], [0, 0, 1, 1], [], []>} : vector<8x8xf32>, vector<8x32xf32>, vector<8x32xf32> -> vector<8x32xf32>
    %65 = vector.extract_strided_slice %40 {offsets = [0, 8], sizes = [8, 8], strides = [1, 1]} : vector<8x32xf32> to vector<8x8xf32>
    %66 = vector.extract_strided_slice %43 {offsets = [0, 8], sizes = [8, 8], strides = [1, 1]} : vector<8x32xf32> to vector<8x8xf32>
    %67 = vector.extract_strided_slice %46 {offsets = [0, 8], sizes = [8, 8], strides = [1, 1]} : vector<8x32xf32> to vector<8x8xf32>
    %cst_47 = arith.constant dense<0.000000e+00> : vector<8x8xf32>
    %68 = tpu.matmul %65, %66, %cst_47 {dimension_numbers = #tpu.dot_dimension_numbers<[1], [1], [0], [0], [0, 0, 1, 0], [], []>} : vector<8x8xf32>, vector<8x8xf32>, vector<8x8xf32> -> vector<8x8xf32>
    %cst_48 = arith.constant 0.353553385 : f32
    %69 = vector.broadcast %cst_48 : f32 to vector<8x8xf32>
    %70 = arith.mulf %68, %69 : vector<8x8xf32>
    %cst_49 = arith.constant dense<0xFF800000> : vector<8xf32>
    %71 = vector.multi_reduction <maximumf>, %70, %cst_49 [1] : vector<8x8xf32> to vector<8xf32>
    %72 = vector.shape_cast %71 : vector<8xf32> to vector<8x1xf32>
    %73 = vector.broadcast %72 : vector<8x1xf32> to vector<8x8xf32>
    %74 = arith.subf %70, %73 : vector<8x8xf32>
    %75 = math.exp %74 : vector<8x8xf32>
    %cst_50 = arith.constant dense<0.000000e+00> : vector<8xf32>
    %76 = vector.multi_reduction <add>, %75, %cst_50 [1] : vector<8x8xf32> to vector<8xf32>
    %77 = vector.shape_cast %76 : vector<8xf32> to vector<8x1xf32>
    %78 = vector.broadcast %77 : vector<8x1xf32> to vector<8x8xf32>
    %79 = arith.divf %75, %78 : vector<8x8xf32>
    %cst_51 = arith.constant dense<0.000000e+00> : vector<8x8xf32>
    %80 = tpu.matmul %79, %67, %cst_51 {dimension_numbers = #tpu.dot_dimension_numbers<[1], [0], [0], [1], [0, 0, 1, 1], [], []>} : vector<8x8xf32>, vector<8x8xf32>, vector<8x8xf32> -> vector<8x8xf32>
    %81 = vector.extract_strided_slice %10 {offsets = [8, 0], sizes = [8, 32], strides = [1, 1]} : vector<32x32xf32> to vector<8x32xf32>
    %cst_52 = arith.constant dense<0.000000e+00> : vector<8x32xf32>
    %82 = tpu.matmul %80, %81, %cst_52 {dimension_numbers = #tpu.dot_dimension_numbers<[1], [0], [0], [1], [0, 0, 1, 1], [], []>} : vector<8x8xf32>, vector<8x32xf32>, vector<8x32xf32> -> vector<8x32xf32>
    %83 = arith.addf %64, %82 : vector<8x32xf32>
    %84 = vector.extract_strided_slice %40 {offsets = [0, 16], sizes = [8, 8], strides = [1, 1]} : vector<8x32xf32> to vector<8x8xf32>
    %85 = vector.extract_strided_slice %43 {offsets = [0, 16], sizes = [8, 8], strides = [1, 1]} : vector<8x32xf32> to vector<8x8xf32>
    %86 = vector.extract_strided_slice %46 {offsets = [0, 16], sizes = [8, 8], strides = [1, 1]} : vector<8x32xf32> to vector<8x8xf32>
    %cst_53 = arith.constant dense<0.000000e+00> : vector<8x8xf32>
    %87 = tpu.matmul %84, %85, %cst_53 {dimension_numbers = #tpu.dot_dimension_numbers<[1], [1], [0], [0], [0, 0, 1, 0], [], []>} : vector<8x8xf32>, vector<8x8xf32>, vector<8x8xf32> -> vector<8x8xf32>
    %cst_54 = arith.constant 0.353553385 : f32
    %88 = vector.broadcast %cst_54 : f32 to vector<8x8xf32>
    %89 = arith.mulf %87, %88 : vector<8x8xf32>
    %cst_55 = arith.constant dense<0xFF800000> : vector<8xf32>
    %90 = vector.multi_reduction <maximumf>, %89, %cst_55 [1] : vector<8x8xf32> to vector<8xf32>
    %91 = vector.shape_cast %90 : vector<8xf32> to vector<8x1xf32>
    %92 = vector.broadcast %91 : vector<8x1xf32> to vector<8x8xf32>
    %93 = arith.subf %89, %92 : vector<8x8xf32>
    %94 = math.exp %93 : vector<8x8xf32>
    %cst_56 = arith.constant dense<0.000000e+00> : vector<8xf32>
    %95 = vector.multi_reduction <add>, %94, %cst_56 [1] : vector<8x8xf32> to vector<8xf32>
    %96 = vector.shape_cast %95 : vector<8xf32> to vector<8x1xf32>
    %97 = vector.broadcast %96 : vector<8x1xf32> to vector<8x8xf32>
    %98 = arith.divf %94, %97 : vector<8x8xf32>
    %cst_57 = arith.constant dense<0.000000e+00> : vector<8x8xf32>
    %99 = tpu.matmul %98, %86, %cst_57 {dimension_numbers = #tpu.dot_dimension_numbers<[1], [0], [0], [1], [0, 0, 1, 1], [], []>} : vector<8x8xf32>, vector<8x8xf32>, vector<8x8xf32> -> vector<8x8xf32>
    %100 = vector.extract_strided_slice %10 {offsets = [16, 0], sizes = [8, 32], strides = [1, 1]} : vector<32x32xf32> to vector<8x32xf32>
    %cst_58 = arith.constant dense<0.000000e+00> : vector<8x32xf32>
    %101 = tpu.matmul %99, %100, %cst_58 {dimension_numbers = #tpu.dot_dimension_numbers<[1], [0], [0], [1], [0, 0, 1, 1], [], []>} : vector<8x8xf32>, vector<8x32xf32>, vector<8x32xf32> -> vector<8x32xf32>
    %102 = arith.addf %83, %101 : vector<8x32xf32>
    %103 = vector.extract_strided_slice %40 {offsets = [0, 24], sizes = [8, 8], strides = [1, 1]} : vector<8x32xf32> to vector<8x8xf32>
    %104 = vector.extract_strided_slice %43 {offsets = [0, 24], sizes = [8, 8], strides = [1, 1]} : vector<8x32xf32> to vector<8x8xf32>
    %105 = vector.extract_strided_slice %46 {offsets = [0, 24], sizes = [8, 8], strides = [1, 1]} : vector<8x32xf32> to vector<8x8xf32>
    %cst_59 = arith.constant dense<0.000000e+00> : vector<8x8xf32>
    %106 = tpu.matmul %103, %104, %cst_59 {dimension_numbers = #tpu.dot_dimension_numbers<[1], [1], [0], [0], [0, 0, 1, 0], [], []>} : vector<8x8xf32>, vector<8x8xf32>, vector<8x8xf32> -> vector<8x8xf32>
    %cst_60 = arith.constant 0.353553385 : f32
    %107 = vector.broadcast %cst_60 : f32 to vector<8x8xf32>
    %108 = arith.mulf %106, %107 : vector<8x8xf32>
    %cst_61 = arith.constant dense<0xFF800000> : vector<8xf32>
    %109 = vector.multi_reduction <maximumf>, %108, %cst_61 [1] : vector<8x8xf32> to vector<8xf32>
    %110 = vector.shape_cast %109 : vector<8xf32> to vector<8x1xf32>
    %111 = vector.broadcast %110 : vector<8x1xf32> to vector<8x8xf32>
    %112 = arith.subf %108, %111 : vector<8x8xf32>
    %113 = math.exp %112 : vector<8x8xf32>
    %cst_62 = arith.constant dense<0.000000e+00> : vector<8xf32>
    %114 = vector.multi_reduction <add>, %113, %cst_62 [1] : vector<8x8xf32> to vector<8xf32>
    %115 = vector.shape_cast %114 : vector<8xf32> to vector<8x1xf32>
    %116 = vector.broadcast %115 : vector<8x1xf32> to vector<8x8xf32>
    %117 = arith.divf %113, %116 : vector<8x8xf32>
    %cst_63 = arith.constant dense<0.000000e+00> : vector<8x8xf32>
    %118 = tpu.matmul %117, %105, %cst_63 {dimension_numbers = #tpu.dot_dimension_numbers<[1], [0], [0], [1], [0, 0, 1, 1], [], []>} : vector<8x8xf32>, vector<8x8xf32>, vector<8x8xf32> -> vector<8x8xf32>
    %119 = vector.extract_strided_slice %10 {offsets = [24, 0], sizes = [8, 32], strides = [1, 1]} : vector<32x32xf32> to vector<8x32xf32>
    %cst_64 = arith.constant dense<0.000000e+00> : vector<8x32xf32>
    %120 = tpu.matmul %118, %119, %cst_64 {dimension_numbers = #tpu.dot_dimension_numbers<[1], [0], [0], [1], [0, 0, 1, 1], [], []>} : vector<8x8xf32>, vector<8x32xf32>, vector<8x32xf32> -> vector<8x32xf32>
    %121 = arith.addf %102, %120 : vector<8x32xf32>
    %122 = vector.broadcast %11 : vector<1x32xf32> to vector<8x32xf32>
    %123 = arith.addf %121, %122 : vector<8x32xf32>
    %124 = arith.addf %17, %123 : vector<8x32xf32>
    %cst_65 = arith.constant dense<0.000000e+00> : vector<8xf32>
    %125 = vector.multi_reduction <add>, %124, %cst_65 [1] : vector<8x32xf32> to vector<8xf32>
    %126 = vector.shape_cast %125 : vector<8xf32> to vector<8x1xf32>
    %cst_66 = arith.constant 3.200000e+01 : f32
    %127 = vector.broadcast %cst_66 : f32 to vector<8x1xf32>
    %128 = arith.divf %126, %127 : vector<8x1xf32>
    %129 = vector.broadcast %128 : vector<8x1xf32> to vector<8x32xf32>
    %130 = arith.subf %124, %129 : vector<8x32xf32>
    %131 = arith.mulf %130, %130 : vector<8x32xf32>
    %cst_67 = arith.constant dense<0.000000e+00> : vector<8xf32>
    %132 = vector.multi_reduction <add>, %131, %cst_67 [1] : vector<8x32xf32> to vector<8xf32>
    %133 = vector.shape_cast %132 : vector<8xf32> to vector<8x1xf32>
    %cst_68 = arith.constant 3.200000e+01 : f32
    %134 = vector.broadcast %cst_68 : f32 to vector<8x1xf32>
    %135 = arith.divf %133, %134 : vector<8x1xf32>
    %cst_69 = arith.constant 9.99999974E-6 : f32
    %136 = vector.broadcast %cst_69 : f32 to vector<8x1xf32>
    %137 = arith.addf %135, %136 : vector<8x1xf32>
    %138 = math.rsqrt %137 : vector<8x1xf32>
    %139 = vector.broadcast %138 : vector<8x1xf32> to vector<8x32xf32>
    %140 = arith.mulf %130, %139 : vector<8x32xf32>
    %141 = vector.broadcast %2 : vector<1x32xf32> to vector<8x32xf32>
    %142 = arith.mulf %140, %141 : vector<8x32xf32>
    %143 = vector.broadcast %3 : vector<1x32xf32> to vector<8x32xf32>
    %144 = arith.addf %142, %143 : vector<8x32xf32>
    %cst_70 = arith.constant dense<0.000000e+00> : vector<8x64xf32>
    %145 = tpu.matmul %144, %12, %cst_70 {dimension_numbers = #tpu.dot_dimension_numbers<[1], [0], [0], [1], [0, 0, 1, 1], [], []>} : vector<8x32xf32>, vector<32x64xf32>, vector<8x64xf32> -> vector<8x64xf32>
    %146 = vector.broadcast %13 : vector<1x64xf32> to vector<8x64xf32>
    %147 = arith.addf %145, %146 : vector<8x64xf32>
    %cst_71 = arith.constant 5.000000e-01 : f32
    %148 = vector.broadcast %cst_71 : f32 to vector<8x64xf32>
    %149 = arith.mulf %148, %147 : vector<8x64xf32>
    %cst_72 = arith.constant 4.471500e-02 : f32
    %150 = vector.broadcast %cst_72 : f32 to vector<8x64xf32>
    %151 = arith.mulf %150, %147 : vector<8x64xf32>
    %152 = arith.mulf %151, %147 : vector<8x64xf32>
    %153 = arith.mulf %152, %147 : vector<8x64xf32>
    %154 = arith.addf %147, %153 : vector<8x64xf32>
    %cst_73 = arith.constant 0.797884583 : f32
    %155 = vector.broadcast %cst_73 : f32 to vector<8x64xf32>
    %156 = arith.mulf %155, %154 : vector<8x64xf32>
    %157 = math.tanh %156 : vector<8x64xf32>
    %cst_74 = arith.constant 1.000000e+00 : f32
    %158 = vector.broadcast %cst_74 : f32 to vector<8x64xf32>
    %159 = arith.addf %158, %157 : vector<8x64xf32>
    %160 = arith.mulf %149, %159 : vector<8x64xf32>
    %cst_75 = arith.constant dense<0.000000e+00> : vector<8x32xf32>
    %161 = tpu.matmul %160, %14, %cst_75 {dimension_numbers = #tpu.dot_dimension_numbers<[1], [0], [0], [1], [0, 0, 1, 1], [], []>} : vector<8x64xf32>, vector<64x32xf32>, vector<8x32xf32> -> vector<8x32xf32>
    %162 = vector.broadcast %15 : vector<1x32xf32> to vector<8x32xf32>
    %163 = arith.addf %161, %162 : vector<8x32xf32>
    %164 = arith.addf %124, %163 : vector<8x32xf32>
    %c0_76 = arith.constant 0 : index
    %c0_77 = arith.constant 0 : index
    %c0_78 = arith.constant 0 : index
    %165 = vector.load %arg18[%c0_76, %c0_77, %c0_78] : memref<1x8x32xf32, #tpu.memory_space<vmem>>, vector<1x8x32xf32>
    %166 = vector.shape_cast %165 : vector<1x8x32xf32> to vector<8x32xf32>
    %167 = vector.shape_cast %164 : vector<8x32xf32> to vector<1x8x32xf32>
    tpu.vector_store %arg18[%c0_76, %c0_77, %c0_78], %167 {strides = array<i32>} : memref<1x8x32xf32, #tpu.memory_space<vmem>>, vector<1x8x32xf32>,
    return
  }
  func.func @transform_0(%arg0: i32) -> (i32, i32, i32) {
    %c0_i32 = arith.constant 0 : i32
    %c0_i32_0 = arith.constant 0 : i32
    %c0_i32_1 = arith.constant 0 : i32
    return %arg0, %c0_i32, %c0_i32_0 : i32, i32, i32
  }
  func.func @transform_1(%arg0: i32) -> (i32, i32) {
    %c0_i32 = arith.constant 0 : i32
    %c0_i32_0 = arith.constant 0 : i32
    %c0_i32_1 = arith.constant 0 : i32
    return %c0_i32, %c0_i32_0 : i32, i32
  }
  func.func @transform_2(%arg0: i32) -> (i32, i32) {
    %c0_i32 = arith.constant 0 : i32
    %c0_i32_0 = arith.constant 0 : i32
    %c0_i32_1 = arith.constant 0 : i32
    return %c0_i32, %c0_i32_0 : i32, i32
  }
  func.func @transform_3(%arg0: i32) -> (i32, i32) {
    %c0_i32 = arith.constant 0 : i32
    %c0_i32_0 = arith.constant 0 : i32
    %c0_i32_1 = arith.constant 0 : i32
    return %c0_i32, %c0_i32_0 : i32, i32
  }
  func.func @transform_4(%arg0: i32) -> (i32, i32) {
    %c0_i32 = arith.constant 0 : i32
    %c0_i32_0 = arith.constant 0 : i32
    %c0_i32_1 = arith.constant 0 : i32
    return %c0_i32, %c0_i32_0 : i32, i32
  }
  func.func @transform_5(%arg0: i32) -> (i32, i32) {
    %c0_i32 = arith.constant 0 : i32
    %c0_i32_0 = arith.constant 0 : i32
    %c0_i32_1 = arith.constant 0 : i32
    return %c0_i32, %c0_i32_0 : i32, i32
  }
  func.func @transform_6(%arg0: i32) -> (i32, i32) {
    %c0_i32 = arith.constant 0 : i32
    %c0_i32_0 = arith.constant 0 : i32
    %c0_i32_1 = arith.constant 0 : i32
    return %c0_i32, %c0_i32_0 : i32, i32
  }
  func.func @transform_7(%arg0: i32) -> (i32, i32) {
    %c0_i32 = arith.constant 0 : i32
    %c0_i32_0 = arith.constant 0 : i32
    %c0_i32_1 = arith.constant 0 : i32
    return %c0_i32, %c0_i32_0 : i32, i32
  }
  func.func @transform_8(%arg0: i32) -> (i32, i32) {
    %c0_i32 = arith.constant 0 : i32
    %c0_i32_0 = arith.constant 0 : i32
    %c0_i32_1 = arith.constant 0 : i32
    return %c0_i32, %c0_i32_0 : i32, i32
  }
  func.func @transform_9(%arg0: i32) -> (i32, i32) {
    %c0_i32 = arith.constant 0 : i32
    %c0_i32_0 = arith.constant 0 : i32
    %c0_i32_1 = arith.constant 0 : i32
    return %c0_i32, %c0_i32_0 : i32, i32
  }
  func.func @transform_10(%arg0: i32) -> (i32, i32) {
    %c0_i32 = arith.constant 0 : i32
    %c0_i32_0 = arith.constant 0 : i32
    %c0_i32_1 = arith.constant 0 : i32
    return %c0_i32, %c0_i32_0 : i32, i32
  }
  func.func @transform_11(%arg0: i32) -> (i32, i32) {
    %c0_i32 = arith.constant 0 : i32
    %c0_i32_0 = arith.constant 0 : i32
    %c0_i32_1 = arith.constant 0 : i32
    return %c0_i32, %c0_i32_0 : i32, i32
  }
  func.func @transform_12(%arg0: i32) -> (i32, i32) {
    %c0_i32 = arith.constant 0 : i32
    %c0_i32_0 = arith.constant 0 : i32
    %c0_i32_1 = arith.constant 0 : i32
    return %c0_i32, %c0_i32_0 : i32, i32
  }
  func.func @transform_13(%arg0: i32) -> (i32, i32) {
    %c0_i32 = arith.constant 0 : i32
    %c0_i32_0 = arith.constant 0 : i32
    %c0_i32_1 = arith.constant 0 : i32
    return %c0_i32, %c0_i32_0 : i32, i32
  }
  func.func @transform_14(%arg0: i32) -> (i32, i32) {
    %c0_i32 = arith.constant 0 : i32
    %c0_i32_0 = arith.constant 0 : i32
    %c0_i32_1 = arith.constant 0 : i32
    return %c0_i32, %c0_i32_0 : i32, i32
  }
  func.func @transform_15(%arg0: i32) -> (i32, i32) {
    %c0_i32 = arith.constant 0 : i32
    %c0_i32_0 = arith.constant 0 : i32
    %c0_i32_1 = arith.constant 0 : i32
    return %c0_i32, %c0_i32_0 : i32, i32
  }
  func.func @transform_16(%arg0: i32) -> (i32, i32) {
    %c0_i32 = arith.constant 0 : i32
    %c0_i32_0 = arith.constant 0 : i32
    %c0_i32_1 = arith.constant 0 : i32
    return %c0_i32, %c0_i32_0 : i32, i32
  }
  func.func @transform_17(%arg0: i32) -> (i32, i32, i32) {
    %c0_i32 = arith.constant 0 : i32
    %c0_i32_0 = arith.constant 0 : i32
    %c0_i32_1 = arith.constant 0 : i32
    return %arg0, %c0_i32, %c0_i32_0 : i32, i32, i32
  }
}

</mosaic_0001>

<llo_original>
// kernel: tpu_custom_call.1
$region0: #{tpu_custom_call.1}
  #allocation0 [shape = 'u32[]', space=smem, size = 0x4, offset = 0x4, fixed_abs, tag = 'smem constant byte address 0x4 - core index']
  #allocation1 [shape = 'u32[144,128]{1,0:T(1,128)}', space=vmem, size = 0x12000, scoped, tag = 'internal scratch']
  %s0 = inlined_call_operand.hbm [shape: f32[2,8,32], index: 0, kind: input, shape index: {}]
  %s1 = inlined_call_operand.vmem [shape: f32[1,32], index: 1, kind: input, shape index: {}]
  %s2 = inlined_call_operand.vmem [shape: f32[1,32], index: 2, kind: input, shape index: {}]
  %s3 = inlined_call_operand.vmem [shape: f32[32,32], index: 3, kind: input, shape index: {}]
  %s4 = inlined_call_operand.vmem [shape: f32[1,32], index: 4, kind: input, shape index: {}]
  %s5 = inlined_call_operand.vmem [shape: f32[32,32], index: 5, kind: input, shape index: {}]
  %s6 = inlined_call_operand.vmem [shape: f32[1,32], index: 6, kind: input, shape index: {}]
  %s7 = inlined_call_operand.vmem [shape: f32[32,32], index: 7, kind: input, shape index: {}]
  %s8 = inlined_call_operand.vmem [shape: f32[1,32], index: 8, kind: input, shape index: {}]
  %s9 = inlined_call_operand.hbm [shape: f32[32,32], index: 9, kind: input, shape index: {}]
  %s10 = inlined_call_operand.vmem [shape: f32[1,32], index: 10, kind: input, shape index: {}]
  %s11 = inlined_call_operand.vmem [shape: f32[1,32], index: 11, kind: input, shape index: {}]
  %s12 = inlined_call_operand.vmem [shape: f32[1,32], index: 12, kind: input, shape index: {}]
  %s13 = inlined_call_operand.hbm [shape: f32[32,64], index: 13, kind: input, shape index: {}]
  %s14 = inlined_call_operand.vmem [shape: f32[1,64], index: 14, kind: input, shape index: {}]
  %s15 = inlined_call_operand.vmem [shape: f32[64,32], index: 15, kind: input, shape index: {}]
  %s16 = inlined_call_operand.vmem [shape: f32[1,32], index: 16, kind: input, shape index: {}]
  %s17 = inlined_call_operand.hbm [shape: f32[2,8,32], index: 17, kind: output, shape index: {}]
  %s18 = sld [smem:[#allocation0]]
  $region113: #{tpu_custom_call.1} parent=0
    _
  %s20 = ssub.s32 1, %s18
  %s21 = scalar_select 0, %s20, %s18
  $region1: #{tpu_custom_call.1} parent=0
    #allocation2 [shape = 'u8[8192]{0}', space=vmem, size = 0x2000, scoped, tag = 'input window, operand 0']
    #allocation3 [shape = 's32[2]{0}', space=sflag, size = 0x8, scoped, tag = 'scoped memory for tpu_custom_call.1']
    #allocation4 [shape = 's32[2]{0}', space=sflag, size = 0x8, scoped, tag = 'scoped memory for tpu_custom_call.1']
    #allocation5 [shape = 'u8[16384]{0}', space=vmem, size = 0x4000, scoped, tag = 'input window, operand 9, single buffered']
    #allocation6 [shape = 's32[1]{0}', space=sflag, size = 0x4, scoped, tag = 'scoped memory for tpu_custom_call.1']
    #allocation7 [shape = 'u8[16384]{0}', space=vmem, size = 0x4000, scoped, tag = 'input window, operand 13, single buffered']
    #allocation8 [shape = 'u8[8192]{0}', space=vmem, size = 0x2000, scoped, tag = 'output window, operand 0']
    %22 = vsyncpa [#allocation3], 0
    %s23 = scalar_lea.sflag [#allocation3], 1
    %24 = vsyncpa %s23, 0
    %25 = vsyncpa [#allocation6], 0
    %26 = vsyncpa [#allocation4], 0
    %s27 = scalar_lea.sflag [#allocation4], 1
    %28 = vsyncpa %s27, 0
    loop: start=0, step=1, limit=4
    $region2: #{tpu_custom_call.1} parent=1 // loop_pre_header
      _
    $region3: #{tpu_custom_call.1} parent=1 // loop_header
      %s30 = sphi 0, %s34
      %p31 = scmp.ge.s32.totalorder %s30, 4
      %s40 = sphi 0, %s42
      %s43 = sphi 0, %s40
      %s44 = sphi 0, %s43
      %s60 = sphi 0, %s44
      %s64 = sphi 0, %s64
      %s66 = sphi 0, %s64
      %s67 = sphi 0, %s66
      %s81 = sphi 0, %s67
      %s85 = sphi 0, %s85
      %s87 = sphi 0, %s85
      %s88 = sphi 0, %s87
      %s102 = sphi 0, %s88
      %s106 = sphi 0, %s106
      %s108 = sphi 0, %s106
      %s109 = sphi 0, %s108
      %s123 = sphi 0, %s109
      %s127 = sphi 0, %s127
      %s129 = sphi 0, %s127
      %s130 = sphi 0, %s129
      %s144 = sphi 0, %s130
      %s148 = sphi 0, %s148
      %s150 = sphi 0, %s148
      %s151 = sphi 0, %s150
      %s165 = sphi 0, %s151
      %s169 = sphi 0, %s169
      %s171 = sphi 0, %s169
      %s172 = sphi 0, %s171
      %s186 = sphi 0, %s172
      %s190 = sphi 0, %s190
      %s192 = sphi 0, %s190
      %s193 = sphi 0, %s192
      %s207 = sphi 0, %s193
      %s211 = sphi 0, %s211
      %s213 = sphi 0, %s211
      %s214 = sphi 0, %s213
      %s228 = sphi 0, %s214
      %s232 = sphi 0, %s232
      %s234 = sphi 0, %s232
      %s235 = sphi 0, %s234
      %s249 = sphi 0, %s235
      %s253 = sphi 0, %s253
      %s255 = sphi 0, %s253
      %s256 = sphi 0, %s255
      %s270 = sphi 0, %s256
      %s274 = sphi 0, %s274
      %s276 = sphi 0, %s274
      %s277 = sphi 0, %s276
      %s291 = sphi 0, %s277
      %s295 = sphi 0, %s295
      %s297 = sphi 0, %s295
      %s298 = sphi 0, %s297
      %s312 = sphi 0, %s298
      %s316 = sphi 0, %s316
      %s318 = sphi 0, %s316
      %s319 = sphi 0, %s318
      %s333 = sphi 0, %s319
      %s337 = sphi 0, %s337
      %s339 = sphi 0, %s337
      %s340 = sphi 0, %s339
      %s354 = sphi 0, %s340
      %s358 = sphi 0, %s358
      %s360 = sphi 0, %s358
      %s361 = sphi 0, %s360
      %s375 = sphi 0, %s361
      %s379 = sphi 0, %s379
      %s381 = sphi 0, %s379
      %s382 = sphi 0, %s381
      %s396 = sphi 0, %s382
      %s402 = sphi 0, %s404
      %s405 = sphi 0, %s402
      %s406 = sphi 0, %s405
      %s422 = sphi 0, %s406
    $region4: #{tpu_custom_call.1} parent=1 // loop_header_branch
      %33 = sbr.rel (%p31) target = $region8
    $region5: #{tpu_custom_call.1} parent=1 // loop_body
      %s35 = ssub.s32 %s30, 1
      %s36 = ssub.s32 %s30, 2
      %s37 = sadd.s32 %s30, 1
      %s38 = ssub.s32 %s30, %s37
      %p39 = scmp.eq.s32.totalorder %s38, 0
      %s41 = sadd.s32 %s40, 1
      %s42 = scalar_select %p39, %s40, %s41
      %p45 = pneg %p39
      %p46 = scmp.eq.s32.totalorder %s30, 1
      %p47 = por %p45, %p46
      %p48 = scmp.ne.s32.totalorder %s40, %s43
      %p49 = scmp.eq.s32.totalorder %s30, 0
      %p50 = por %p48, %p49
      %p51 = scmp.ne.s32.totalorder %s40, %s43
      %p52 = scmp.eq.s32.totalorder %s35, 1
      %p53 = por %p51, %p52
      %p54 = scmp.ne.s32.totalorder %s43, %s44
      %p55 = scmp.eq.s32.totalorder %s35, 0
      %p56 = por %p54, %p55
      %p57 = scmp.ne.s32.totalorder %s43, %s44
      %p58 = scmp.eq.s32.totalorder %s36, 1
      %p59 = por %p57, %p58
      %p61 = scmp.ne.s32.totalorder %s44, %s60
      %p62 = scmp.eq.s32.totalorder %s36, 0
      %p63 = por %p61, %p62
      %s65 = sadd.s32 %s64, 1
      %p68 = scmp.eq.s32.totalorder %s30, 1
      %p69 = scmp.ne.s32.totalorder %s64, %s66
      %p70 = scmp.eq.s32.totalorder %s30, 0
      %p71 = por %p69, %p70
      %p72 = scmp.ne.s32.totalorder %s64, %s66
      %p73 = scmp.eq.s32.totalorder %s35, 1
      %p74 = por %p72, %p73
      %p75 = scmp.ne.s32.totalorder %s66, %s67
      %p76 = scmp.eq.s32.totalorder %s35, 0
      %p77 = por %p75, %p76
      %p78 = scmp.ne.s32.totalorder %s66, %s67
      %p79 = scmp.eq.s32.totalorder %s36, 1
      %p80 = por %p78, %p79
      %p82 = scmp.ne.s32.totalorder %s67, %s81
      %p83 = scmp.eq.s32.totalorder %s36, 0
      %p84 = por %p82, %p83
      %s86 = sadd.s32 %s85, 1
      %p89 = scmp.eq.s32.totalorder %s30, 1
      %p90 = scmp.ne.s32.totalorder %s85, %s87
      %p91 = scmp.eq.s32.totalorder %s30, 0
      %p92 = por %p90, %p91
      %p93 = scmp.ne.s32.totalorder %s85, %s87
      %p94 = scmp.eq.s32.totalorder %s35, 1
      %p95 = por %p93, %p94
      %p96 = scmp.ne.s32.totalorder %s87, %s88
      %p97 = scmp.eq.s32.totalorder %s35, 0
      %p98 = por %p96, %p97
      %p99 = scmp.ne.s32.totalorder %s87, %s88
      %p100 = scmp.eq.s32.totalorder %s36, 1
      %p101 = por %p99, %p100
      %p103 = scmp.ne.s32.totalorder %s88, %s102
      %p104 = scmp.eq.s32.totalorder %s36, 0
      %p105 = por %p103, %p104
      %s107 = sadd.s32 %s106, 1
      %p110 = scmp.eq.s32.totalorder %s30, 1
      %p111 = scmp.ne.s32.totalorder %s106, %s108
      %p112 = scmp.eq.s32.totalorder %s30, 0
      %p113 = por %p111, %p112
      %p114 = scmp.ne.s32.totalorder %s106, %s108
      %p115 = scmp.eq.s32.totalorder %s35, 1
      %p116 = por %p114, %p115
      %p117 = scmp.ne.s32.totalorder %s108, %s109
      %p118 = scmp.eq.s32.totalorder %s35, 0
      %p119 = por %p117, %p118
      %p120 = scmp.ne.s32.totalorder %s108, %s109
      %p121 = scmp.eq.s32.totalorder %s36, 1
      %p122 = por %p120, %p121
      %p124 = scmp.ne.s32.totalorder %s109, %s123
      %p125 = scmp.eq.s32.totalorder %s36, 0
      %p126 = por %p124, %p125
      %s128 = sadd.s32 %s127, 1
      %p131 = scmp.eq.s32.totalorder %s30, 1
      %p132 = scmp.ne.s32.totalorder %s127, %s129
      %p133 = scmp.eq.s32.totalorder %s30, 0
      %p134 = por %p132, %p133
      %p135 = scmp.ne.s32.totalorder %s127, %s129
      %p136 = scmp.eq.s32.totalorder %s35, 1
      %p137 = por %p135, %p136
      %p138 = scmp.ne.s32.totalorder %s129, %s130
      %p139 = scmp.eq.s32.totalorder %s35, 0
      %p140 = por %p138, %p139
      %p141 = scmp.ne.s32.totalorder %s129, %s130
      %p142 = scmp.eq.s32.totalorder %s36, 1
      %p143 = por %p141, %p142
      %p145 = scmp.ne.s32.totalorder %s130, %s144
      %p146 = scmp.eq.s32.totalorder %s36, 0
      %p147 = por %p145, %p146
      %s149 = sadd.s32 %s148, 1
      %p152 = scmp.eq.s32.totalorder %s30, 1
      %p153 = scmp.ne.s32.totalorder %s148, %s150
      %p154 = scmp.eq.s32.totalorder %s30, 0
      %p155 = por %p153, %p154
      %p156 = scmp.ne.s32.totalorder %s148, %s150
      %p157 = scmp.eq.s32.totalorder %s35, 1
      %p158 = por %p156, %p157
      %p159 = scmp.ne.s32.totalorder %s150, %s151
      %p160 = scmp.eq.s32.totalorder %s35, 0
      %p161 = por %p159, %p160
      %p162 = scmp.ne.s32.totalorder %s150, %s151
      %p163 = scmp.eq.s32.totalorder %s36, 1
      %p164 = por %p162, %p163
      %p166 = scmp.ne.s32.totalorder %s151, %s165
      %p167 = scmp.eq.s32.totalorder %s36, 0
      %p168 = por %p166, %p167
      %s170 = sadd.s32 %s169, 1
      %p173 = scmp.eq.s32.totalorder %s30, 1
      %p174 = scmp.ne.s32.totalorder %s169, %s171
      %p175 = scmp.eq.s32.totalorder %s30, 0
      %p176 = por %p174, %p175
      %p177 = scmp.ne.s32.totalorder %s169, %s171
      %p178 = scmp.eq.s32.totalorder %s35, 1
      %p179 = por %p177, %p178
      %p180 = scmp.ne.s32.totalorder %s171, %s172
      %p181 = scmp.eq.s32.totalorder %s35, 0
      %p182 = por %p180, %p181
      %p183 = scmp.ne.s32.totalorder %s171, %s172
      %p184 = scmp.eq.s32.totalorder %s36, 1
      %p185 = por %p183, %p184
      %p187 = scmp.ne.s32.totalorder %s172, %s186
      %p188 = scmp.eq.s32.totalorder %s36, 0
      %p189 = por %p187, %p188
      %s191 = sadd.s32 %s190, 1
      %p194 = scmp.eq.s32.totalorder %s30, 1
      %p195 = scmp.ne.s32.totalorder %s190, %s192
      %p196 = scmp.eq.s32.totalorder %s30, 0
      %p197 = por %p195, %p196
      %p198 = scmp.ne.s32.totalorder %s190, %s192
      %p199 = scmp.eq.s32.totalorder %s35, 1
      %p200 = por %p198, %p199
      %p201 = scmp.ne.s32.totalorder %s192, %s193
      %p202 = scmp.eq.s32.totalorder %s35, 0
      %p203 = por %p201, %p202
      %p204 = scmp.ne.s32.totalorder %s192, %s193
      %p205 = scmp.eq.s32.totalorder %s36, 1
      %p206 = por %p204, %p205
      %p208 = scmp.ne.s32.totalorder %s193, %s207
      %p209 = scmp.eq.s32.totalorder %s36, 0
      %p210 = por %p208, %p209
      %s212 = sadd.s32 %s211, 1
      %p215 = scmp.eq.s32.totalorder %s30, 1
      %p216 = scmp.ne.s32.totalorder %s211, %s213
      %p217 = scmp.eq.s32.totalorder %s30, 0
      %p218 = por %p216, %p217
      %p219 = scmp.ne.s32.totalorder %s211, %s213
      %p220 = scmp.eq.s32.totalorder %s35, 1
      %p221 = por %p219, %p220
      %p222 = scmp.ne.s32.totalorder %s213, %s214
      %p223 = scmp.eq.s32.totalorder %s35, 0
      %p224 = por %p222, %p223
      %p225 = scmp.ne.s32.totalorder %s213, %s214
      %p226 = scmp.eq.s32.totalorder %s36, 1
      %p227 = por %p225, %p226
      %p229 = scmp.ne.s32.totalorder %s214, %s228
      %p230 = scmp.eq.s32.totalorder %s36, 0
      %p231 = por %p229, %p230
      %s233 = sadd.s32 %s232, 1
      %p236 = scmp.eq.s32.totalorder %s30, 1
      %p237 = scmp.ne.s32.totalorder %s232, %s234
      %p238 = scmp.eq.s32.totalorder %s30, 0
      %p239 = por %p237, %p238
      %p240 = scmp.ne.s32.totalorder %s232, %s234
      %p241 = scmp.eq.s32.totalorder %s35, 1
      %p242 = por %p240, %p241
      %p243 = scmp.ne.s32.totalorder %s234, %s235
      %p244 = scmp.eq.s32.totalorder %s35, 0
      %p245 = por %p243, %p244
      %p246 = scmp.ne.s32.totalorder %s234, %s235
      %p247 = scmp.eq.s32.totalorder %s36, 1
      %p248 = por %p246, %p247
      %p250 = scmp.ne.s32.totalorder %s235, %s249
      %p251 = scmp.eq.s32.totalorder %s36, 0
      %p252 = por %p250, %p251
      %s254 = sadd.s32 %s253, 1
      %p257 = scmp.eq.s32.totalorder %s30, 1
      %p258 = scmp.ne.s32.totalorder %s253, %s255
      %p259 = scmp.eq.s32.totalorder %s30, 0
      %p260 = por %p258, %p259
      %p261 = scmp.ne.s32.totalorder %s253, %s255
      %p262 = scmp.eq.s32.totalorder %s35, 1
      %p263 = por %p261, %p262
      %p264 = scmp.ne.s32.totalorder %s255, %s256
      %p265 = scmp.eq.s32.totalorder %s35, 0
      %p266 = por %p264, %p265
      %p267 = scmp.ne.s32.totalorder %s255, %s256
      %p268 = scmp.eq.s32.totalorder %s36, 1
      %p269 = por %p267, %p268
      %p271 = scmp.ne.s32.totalorder %s256, %s270
      %p272 = scmp.eq.s32.totalorder %s36, 0
      %p273 = por %p271, %p272
      %s275 = sadd.s32 %s274, 1
      %p278 = scmp.eq.s32.totalorder %s30, 1
      %p279 = scmp.ne.s32.totalorder %s274, %s276
      %p280 = scmp.eq.s32.totalorder %s30, 0
      %p281 = por %p279, %p280
      %p282 = scmp.ne.s32.totalorder %s274, %s276
      %p283 = scmp.eq.s32.totalorder %s35, 1
      %p284 = por %p282, %p283
      %p285 = scmp.ne.s32.totalorder %s276, %s277
      %p286 = scmp.eq.s32.totalorder %s35, 0
      %p287 = por %p285, %p286
      %p288 = scmp.ne.s32.totalorder %s276, %s277
      %p289 = scmp.eq.s32.totalorder %s36, 1
      %p290 = por %p288, %p289
      %p292 = scmp.ne.s32.totalorder %s277, %s291
      %p293 = scmp.eq.s32.totalorder %s36, 0
      %p294 = por %p292, %p293
      %s296 = sadd.s32 %s295, 1
      %p299 = scmp.eq.s32.totalorder %s30, 1
      %p300 = scmp.ne.s32.totalorder %s295, %s297
      %p301 = scmp.eq.s32.totalorder %s30, 0
      %p302 = por %p300, %p301
      %p303 = scmp.ne.s32.totalorder %s295, %s297
      %p304 = scmp.eq.s32.totalorder %s35, 1
      %p305 = por %p303, %p304
      %p306 = scmp.ne.s32.totalorder %s297, %s298
      %p307 = scmp.eq.s32.totalorder %s35, 0
      %p308 = por %p306, %p307
      %p309 = scmp.ne.s32.totalorder %s297, %s298
      %p310 = scmp.eq.s32.totalorder %s36, 1
      %p311 = por %p309, %p310
      %p313 = scmp.ne.s32.totalorder %s298, %s312
      %p314 = scmp.eq.s32.totalorder %s36, 0
      %p315 = por %p313, %p314
      %s317 = sadd.s32 %s316, 1
      %p320 = scmp.eq.s32.totalorder %s30, 1
      %p321 = scmp.ne.s32.totalorder %s316, %s318
      %p322 = scmp.eq.s32.totalorder %s30, 0
      %p323 = por %p321, %p322
      %p324 = scmp.ne.s32.totalorder %s316, %s318
      %p325 = scmp.eq.s32.totalorder %s35, 1
      %p326 = por %p324, %p325
      %p327 = scmp.ne.s32.totalorder %s318, %s319
      %p328 = scmp.eq.s32.totalorder %s35, 0
      %p329 = por %p327, %p328
      %p330 = scmp.ne.s32.totalorder %s318, %s319
      %p331 = scmp.eq.s32.totalorder %s36, 1
      %p332 = por %p330, %p331
      %p334 = scmp.ne.s32.totalorder %s319, %s333
      %p335 = scmp.eq.s32.totalorder %s36, 0
      %p336 = por %p334, %p335
      %s338 = sadd.s32 %s337, 1
      %p341 = scmp.eq.s32.totalorder %s30, 1
      %p342 = scmp.ne.s32.totalorder %s337, %s339
      %p343 = scmp.eq.s32.totalorder %s30, 0
      %p344 = por %p342, %p343
      %p345 = scmp.ne.s32.totalorder %s337, %s339
      %p346 = scmp.eq.s32.totalorder %s35, 1
      %p347 = por %p345, %p346
      %p348 = scmp.ne.s32.totalorder %s339, %s340
      %p349 = scmp.eq.s32.totalorder %s35, 0
      %p350 = por %p348, %p349
      %p351 = scmp.ne.s32.totalorder %s339, %s340
      %p352 = scmp.eq.s32.totalorder %s36, 1
      %p353 = por %p351, %p352
      %p355 = scmp.ne.s32.totalorder %s340, %s354
      %p356 = scmp.eq.s32.totalorder %s36, 0
      %p357 = por %p355, %p356
      %s359 = sadd.s32 %s358, 1
      %p362 = scmp.eq.s32.totalorder %s30, 1
      %p363 = scmp.ne.s32.totalorder %s358, %s360
      %p364 = scmp.eq.s32.totalorder %s30, 0
      %p365 = por %p363, %p364
      %p366 = scmp.ne.s32.totalorder %s358, %s360
      %p367 = scmp.eq.s32.totalorder %s35, 1
      %p368 = por %p366, %p367
      %p369 = scmp.ne.s32.totalorder %s360, %s361
      %p370 = scmp.eq.s32.totalorder %s35, 0
      %p371 = por %p369, %p370
      %p372 = scmp.ne.s32.totalorder %s360, %s361
      %p373 = scmp.eq.s32.totalorder %s36, 1
      %p374 = por %p372, %p373
      %p376 = scmp.ne.s32.totalorder %s361, %s375
      %p377 = scmp.eq.s32.totalorder %s36, 0
      %p378 = por %p376, %p377
      %s380 = sadd.s32 %s379, 1
      %p383 = scmp.eq.s32.totalorder %s30, 1
      %p384 = scmp.ne.s32.totalorder %s379, %s381
      %p385 = scmp.eq.s32.totalorder %s30, 0
      %p386 = por %p384, %p385
      %p387 = scmp.ne.s32.totalorder %s379, %s381
      %p388 = scmp.eq.s32.totalorder %s35, 1
      %p389 = por %p387, %p388
      %p390 = scmp.ne.s32.totalorder %s381, %s382
      %p391 = scmp.eq.s32.totalorder %s35, 0
      %p392 = por %p390, %p391
      %p393 = scmp.ne.s32.totalorder %s381, %s382
      %p394 = scmp.eq.s32.totalorder %s36, 1
      %p395 = por %p393, %p394
      %p397 = scmp.ne.s32.totalorder %s382, %s396
      %p398 = scmp.eq.s32.totalorder %s36, 0
      %p399 = por %p397, %p398
      %s400 = ssub.s32 %s30, %s37
      %p401 = scmp.eq.s32.totalorder %s400, 0
      %s403 = sadd.s32 %s402, 1
      %s404 = scalar_select %p401, %s402, %s403
      %p407 = pneg %p401
      %p408 = scmp.eq.s32.totalorder %s30, 1
      %p409 = por %p407, %p408
      %p410 = scmp.ne.s32.totalorder %s402, %s405
      %p411 = scmp.eq.s32.totalorder %s30, 0
      %p412 = por %p410, %p411
      %p413 = scmp.ne.s32.totalorder %s402, %s405
      %p414 = scmp.eq.s32.totalorder %s35, 1
      %p415 = por %p413, %p414
      %p416 = scmp.ne.s32.totalorder %s405, %s406
      %p417 = scmp.eq.s32.totalorder %s35, 0
      %p418 = por %p416, %p417
      %p419 = scmp.ne.s32.totalorder %s405, %s406
      %p420 = scmp.eq.s32.totalorder %s36, 1
      %p421 = por %p419, %p420
      %p423 = scmp.ne.s32.totalorder %s406, %s422
      %p424 = scmp.eq.s32.totalorder %s36, 0
      %p425 = por %p423, %p424
      %p426 = scmp.le.s32.totalorder 1, %s30
      %p427 = scmp.lt.s32.totalorder %s30, 3
      %p428 = pnand %p426, %p427
      %p429 = pneg %p428
      // Predicated region
      $region9: #{tpu_custom_call.1} parent=5 // pred_check
        _
      $region10: #{tpu_custom_call.1} parent=5 // pred_check_branch
        %431 = sbr.rel (%p428) target = $region12
      $region11: #{tpu_custom_call.1} parent=5 // pred_region
        %s432 = ssub.s32 %s30, 1
        // Predicated region
        $region13: #{tpu_custom_call.1} parent=11 // pred_check
          %p433 = pneg %p77
        $region14: #{tpu_custom_call.1} parent=11 // pred_check_branch
          %435 = sbr.rel (%p433) target = $region16
        $region15: #{tpu_custom_call.1} parent=11 // pred_region
          _
        $region16: #{tpu_custom_call.1} parent=11 // pred_fallthru
          _
        // Predicated region
        $region17: #{tpu_custom_call.1} parent=11 // pred_check
          %p436 = pneg %p98
        $region18: #{tpu_custom_call.1} parent=11 // pred_check_branch
          %438 = sbr.rel (%p436) target = $region20
        $region19: #{tpu_custom_call.1} parent=11 // pred_region
          _
        $region20: #{tpu_custom_call.1} parent=11 // pred_fallthru
          _
        // Predicated region
        $region21: #{tpu_custom_call.1} parent=11 // pred_check
          %p439 = pneg %p119
        $region22: #{tpu_custom_call.1} parent=11 // pred_check_branch
          %441 = sbr.rel (%p439) target = $region24
        $region23: #{tpu_custom_call.1} parent=11 // pred_region
          _
        $region24: #{tpu_custom_call.1} parent=11 // pred_fallthru
          _
        // Predicated region
        $region25: #{tpu_custom_call.1} parent=11 // pred_check
          %p442 = pneg %p140
        $region26: #{tpu_custom_call.1} parent=11 // pred_check_branch
          %444 = sbr.rel (%p442) target = $region28
        $region27: #{tpu_custom_call.1} parent=11 // pred_region
          _
        $region28: #{tpu_custom_call.1} parent=11 // pred_fallthru
          _
        // Predicated region
        $region29: #{tpu_custom_call.1} parent=11 // pred_check
          %p445 = pneg %p161
        $region30: #{tpu_custom_call.1} parent=11 // pred_check_branch
          %447 = sbr.rel (%p445) target = $region32
        $region31: #{tpu_custom_call.1} parent=11 // pred_region
          _
        $region32: #{tpu_custom_call.1} parent=11 // pred_fallthru
          _
        // Predicated region
        $region33: #{tpu_custom_call.1} parent=11 // pred_check
          %p448 = pneg %p182
        $region34: #{tpu_custom_call.1} parent=11 // pred_check_branch
          %450 = sbr.rel (%p448) target = $region36
        $region35: #{tpu_custom_call.1} parent=11 // pred_region
          _
        $region36: #{tpu_custom_call.1} parent=11 // pred_fallthru
          _
        // Predicated region
        $region37: #{tpu_custom_call.1} parent=11 // pred_check
          %p451 = pneg %p203
        $region38: #{tpu_custom_call.1} parent=11 // pred_check_branch
          %453 = sbr.rel (%p451) target = $region40
        $region39: #{tpu_custom_call.1} parent=11 // pred_region
          _
        $region40: #{tpu_custom_call.1} parent=11 // pred_fallthru
          _
        // Predicated region
        $region41: #{tpu_custom_call.1} parent=11 // pred_check
          %p454 = pneg %p224
        $region42: #{tpu_custom_call.1} parent=11 // pred_check_branch
          %456 = sbr.rel (%p454) target = $region44
        $region43: #{tpu_custom_call.1} parent=11 // pred_region
          _
        $region44: #{tpu_custom_call.1} parent=11 // pred_fallthru
          _
        // Predicated region
        $region45: #{tpu_custom_call.1} parent=11 // pred_check
          %p457 = pneg %p245
        $region46: #{tpu_custom_call.1} parent=11 // pred_check_branch
          %459 = sbr.rel (%p457) target = $region48
        $region47: #{tpu_custom_call.1} parent=11 // pred_region
          %s461 = ssub.s32 512, 512
          %462 = vsyncadd [#allocation6], %s461
          %s463 = sshll.u32 [#allocation5], 4
          %s464 = int_to_ptr.vmem [resolvable:$true] %s463
          %469 = dma.hbm_to_vmem [thread:$0]  %s9, 512, %s464, [#allocation6], 128, 128, 8
        $region48: #{tpu_custom_call.1} parent=11 // pred_fallthru
          _
        // Predicated region
        $region49: #{tpu_custom_call.1} parent=11 // pred_check
          %p470 = pneg %p266
        $region50: #{tpu_custom_call.1} parent=11 // pred_check_branch
          %472 = sbr.rel (%p470) target = $region52
        $region51: #{tpu_custom_call.1} parent=11 // pred_region
          _
        $region52: #{tpu_custom_call.1} parent=11 // pred_fallthru
          _
        // Predicated region
        $region53: #{tpu_custom_call.1} parent=11 // pred_check
          %p473 = pneg %p287
        $region54: #{tpu_custom_call.1} parent=11 // pred_check_branch
          %475 = sbr.rel (%p473) target = $region56
        $region55: #{tpu_custom_call.1} parent=11 // pred_region
          _
        $region56: #{tpu_custom_call.1} parent=11 // pred_fallthru
          _
        // Predicated region
        $region57: #{tpu_custom_call.1} parent=11 // pred_check
          %p476 = pneg %p308
        $region58: #{tpu_custom_call.1} parent=11 // pred_check_branch
          %478 = sbr.rel (%p476) target = $region60
        $region59: #{tpu_custom_call.1} parent=11 // pred_region
          _
        $region60: #{tpu_custom_call.1} parent=11 // pred_fallthru
          _
        // Predicated region
        $region61: #{tpu_custom_call.1} parent=11 // pred_check
          %p479 = pneg %p329
        $region62: #{tpu_custom_call.1} parent=11 // pred_check_branch
          %481 = sbr.rel (%p479) target = $region64
        $region63: #{tpu_custom_call.1} parent=11 // pred_region
          %s483 = ssub.s32 512, 512
          %484 = vsyncadd [#allocation6], %s483
          %s485 = sshll.u32 [#allocation7], 4
          %s486 = int_to_ptr.vmem [resolvable:$true] %s485
          %491 = dma.hbm_to_vmem [thread:$0]  %s13, 512, %s486, [#allocation6], 128, 128, 8
        $region64: #{tpu_custom_call.1} parent=11 // pred_fallthru
          _
        // Predicated region
        $region65: #{tpu_custom_call.1} parent=11 // pred_check
          %p492 = pneg %p350
        $region66: #{tpu_custom_call.1} parent=11 // pred_check_branch
          %494 = sbr.rel (%p492) target = $region68
        $region67: #{tpu_custom_call.1} parent=11 // pred_region
          _
        $region68: #{tpu_custom_call.1} parent=11 // pred_fallthru
          _
        // Predicated region
        $region69: #{tpu_custom_call.1} parent=11 // pred_check
          %p495 = pneg %p371
        $region70: #{tpu_custom_call.1} parent=11 // pred_check_branch
          %497 = sbr.rel (%p495) target = $region72
        $region71: #{tpu_custom_call.1} parent=11 // pred_region
          _
        $region72: #{tpu_custom_call.1} parent=11 // pred_fallthru
          _
        // Predicated region
        $region73: #{tpu_custom_call.1} parent=11 // pred_check
          %p498 = pneg %p392
        $region74: #{tpu_custom_call.1} parent=11 // pred_check_branch
          %500 = sbr.rel (%p498) target = $region76
        $region75: #{tpu_custom_call.1} parent=11 // pred_region
          _
        $region76: #{tpu_custom_call.1} parent=11 // pred_fallthru
          _
      $region12: #{tpu_custom_call.1} parent=5 // pred_fallthru
        _
      %p501 = scmp.lt.s32.totalorder %s30, 2
      // Predicated region
      $region77: #{tpu_custom_call.1} parent=5 // pred_check
        %p502 = pneg %p501
      $region78: #{tpu_custom_call.1} parent=5 // pred_check_branch
        %504 = sbr.rel (%p502) target = $region80
      $region79: #{tpu_custom_call.1} parent=5 // pred_region
        // Predicated region
        $region81: #{tpu_custom_call.1} parent=79 // pred_check
          %p505 = pneg %p50
        $region82: #{tpu_custom_call.1} parent=79 // pred_check_branch
          %507 = sbr.rel (%p505) target = $region84
        $region83: #{tpu_custom_call.1} parent=79 // pred_region
          %s508 = sand.u32 %s40, 1
          %s509 = scalar_lea.sflag [#allocation3], %s508
          %s510 = sand.u32 %s40, 1
          %s511 = smul.addr %s510, 8
          %s512 = scalar_lea.vmem [#allocation2], %s511
          %s514 = ssub.s32 128, 128
          %515 = vsyncadd %s509, %s514
          %s516 = smul.addr %s30, 128
          %s517 = scalar_lea.hbm %s0, %s516
          %s519 = sshll.u32 %s512, 4
          %s520 = int_to_ptr.vmem [resolvable:$true] %s519
          %522 = dma.hbm_to_vmem [thread:$0]  %s517, 128, %s520, %s509
        $region84: #{tpu_custom_call.1} parent=79 // pred_fallthru
          _
      $region80: #{tpu_custom_call.1} parent=5 // pred_fallthru
        _
      %p523 = scmp.le.s32.totalorder 1, %s30
      %p524 = scmp.lt.s32.totalorder %s30, 3
      %p525 = pnand %p523, %p524
      %p526 = pneg %p525
      // Predicated region
      $region85: #{tpu_custom_call.1} parent=5 // pred_check
        _
      $region86: #{tpu_custom_call.1} parent=5 // pred_check_branch
        %528 = sbr.rel (%p525) target = $region88
      $region87: #{tpu_custom_call.1} parent=5 // pred_region
        %s529 = ssub.s32 %s30, 1
        %s530 = sand.u32 %s43, 1
        %s531 = scalar_lea.sflag [#allocation3], %s530
        %s532 = sand.u32 %s43, 1
        %s533 = smul.addr %s532, 8
        %s534 = scalar_lea.vmem [#allocation2], %s533
        // Predicated region
        $region89: #{tpu_custom_call.1} parent=87 // pred_check
          %p535 = pneg %p56
        $region90: #{tpu_custom_call.1} parent=87 // pred_check_branch
          %537 = sbr.rel (%p535) target = $region92
        $region91: #{tpu_custom_call.1} parent=87 // pred_region
          %538 = dma.done %s531, 128
        $region92: #{tpu_custom_call.1} parent=87 // pred_fallthru
          _
        // Predicated region
        $region93: #{tpu_custom_call.1} parent=87 // pred_check
          %p539 = pneg %p245
        $region94: #{tpu_custom_call.1} parent=87 // pred_check_branch
          %541 = sbr.rel (%p539) target = $region96
        $region95: #{tpu_custom_call.1} parent=87 // pred_region
          %542 = dma.done [#allocation6], 512
        $region96: #{tpu_custom_call.1} parent=87 // pred_fallthru
          _
        // Predicated region
        $region97: #{tpu_custom_call.1} parent=87 // pred_check
          %p543 = pneg %p329
        $region98: #{tpu_custom_call.1} parent=87 // pred_check_branch
          %545 = sbr.rel (%p543) target = $region100
        $region99: #{tpu_custom_call.1} parent=87 // pred_region
          %546 = dma.done [#allocation6], 512
        $region100: #{tpu_custom_call.1} parent=87 // pred_fallthru
          _
        %s547 = sand.u32 %s43, 1
        %s548 = scalar_lea.sflag [#allocation3], %s547
        %s549 = sand.u32 %s43, 1
        %s550 = smul.addr %s549, 8
        %s551 = scalar_lea.vmem [#allocation2], %s550
        %p552 = pneg %p56
        %p553 = pneg %p53
        %p554 = pneg %p77
        %p555 = pneg %p74
        %p556 = pneg %p98
        %p557 = pneg %p95
        %p558 = pneg %p119
        %p559 = pneg %p116
        %p560 = pneg %p140
        %p561 = pneg %p137
        %p562 = pneg %p161
        %p563 = pneg %p158
        %p564 = pneg %p182
        %p565 = pneg %p179
        %p566 = pneg %p203
        %p567 = pneg %p200
        %p568 = pneg %p224
        %p569 = pneg %p221
        %p570 = pneg %p245
        %p571 = pneg %p242
        %p572 = pneg %p266
        %p573 = pneg %p263
        %p574 = pneg %p287
        %p575 = pneg %p284
        %p576 = pneg %p308
        %p577 = pneg %p305
        %p578 = pneg %p329
        %p579 = pneg %p326
        %p580 = pneg %p350
        %p581 = pneg %p347
        %p582 = pneg %p371
        %p583 = pneg %p368
        %p584 = pneg %p392
        %p585 = pneg %p389
        %p586 = pneg %p418
        %p587 = pneg %p415
        %s588 = sand.u32 %s405, 1
        %s589 = scalar_lea.sflag [#allocation4], %s588
        %s590 = sand.u32 %s405, 1
        %s591 = smul.addr %s590, 8
        %s592 = scalar_lea.vmem [#allocation8], %s591
        %v593 = vld [vmem:[%s1] sm:$0x1]
        %v594 = vld [vmem:[%s2] sm:$0x1]
        %v595 = vld [vmem:[%s11] sm:$0x1]
        %v596 = vld [vmem:[%s12] sm:$0x1]
        %v597 = vld [vmem:[%s3] sm:$0xff]
        %v598 = vld [vmem:[%s3 + $0x8] sm:$0xff]
        %v599 = vld [vmem:[%s3 + $0x10] sm:$0xff]
        %v600 = vld [vmem:[%s3 + $0x18] sm:$0xff]
        %v601 = vld [vmem:[%s4] sm:$0x1]
        %v602 = vld [vmem:[%s5] sm:$0xff]
        %v603 = vld [vmem:[%s5 + $0x8] sm:$0xff]
        %v604 = vld [vmem:[%s5 + $0x10] sm:$0xff]
        %v605 = vld [vmem:[%s5 + $0x18] sm:$0xff]
        %v606 = vld [vmem:[%s6] sm:$0x1]
        %v607 = vld [vmem:[%s7] sm:$0xff]
        %v608 = vld [vmem:[%s7 + $0x8] sm:$0xff]
        %v609 = vld [vmem:[%s7 + $0x10] sm:$0xff]
        %v610 = vld [vmem:[%s7 + $0x18] sm:$0xff]
        %v611 = vld [vmem:[%s8] sm:$0x1]
        %v612 = vld [vmem:[#allocation5] sm:$0xff]
        %v613 = vld [vmem:[#allocation5 + $0x8] sm:$0xff]
        %v614 = vld [vmem:[#allocation5 + $0x10] sm:$0xff]
        %v615 = vld [vmem:[#allocation5 + $0x18] sm:$0xff]
        %v616 = vld [vmem:[%s10] sm:$0x1]
        %v617 = vld [vmem:[#allocation7] sm:$0xff]
        %v618 = vld [vmem:[#allocation7 + $0x8] sm:$0xff]
        %v619 = vld [vmem:[#allocation7 + $0x10] sm:$0xff]
        %v620 = vld [vmem:[#allocation7 + $0x18] sm:$0xff]
        %v621 = vld [vmem:[%s14] sm:$0x1]
        %v622 = vld [vmem:[%s15] sm:$0xff]
        %v623 = vld [vmem:[%s15 + $0x8] sm:$0xff]
        %v624 = vld [vmem:[%s15 + $0x10] sm:$0xff]
        %v625 = vld [vmem:[%s15 + $0x18] sm:$0xff]
        %v626 = vld [vmem:[%s15 + $0x20] sm:$0xff]
        %v627 = vld [vmem:[%s15 + $0x28] sm:$0xff]
        %v628 = vld [vmem:[%s15 + $0x30] sm:$0xff]
        %v629 = vld [vmem:[%s15 + $0x38] sm:$0xff]
        %v630 = vld [vmem:[%s16] sm:$0x1]
        %v631 = vld [vmem:[%s534] sm:$0xff]
        %vm632 = vcmask 261120
        %v633 = vsel %vm632, %v631, 0.0
        %634 = vadd.xlane.f32.xlu0 %v633
        %v635 = vpop.xlane.xlu0 %634
        %v636 = vrcp.pop 32.0
        %v637 = vmul.f32 %v635, %v636
        %v638 = vsub.f32 %v631, %v637
        %v639 = vmul.f32 %v638, %v638
        %v640 = vsel %vm632, %v639, 0.0
        %641 = vadd.xlane.f32.xlu0 %v640
        %v642 = vpop.xlane.xlu0 %641
        %v643 = vmul.f32 %v642, %v636
        %v644 = vadd.f32 %v643, 1e-05
        %v645 = vrsqrt.pop %v644
        %v646 = vmul.f32 %v638, %v645
        %v648 = vlaneseq
        %v649 = vshrl.u32 %v648, 7
        %v650 = vsub.s32 0, %v649
        %v651 = vrot.slane %v593, %v650
        %v653 = vmul.f32 %v646, %v651
        %v655 = vlaneseq
        %v656 = vshrl.u32 %v655, 7
        %v657 = vsub.s32 0, %v656
        %v658 = vrot.slane %v594, %v657
        %v660 = vadd.f32 %v653, %v658
        %v662 = vlaneseq
        %v663 = vshrl.u32 %v662, 7
        %v664 = vsub.s32 0, %v663
        %v665 = vrot.slane %v601, %v664
        %v668 = vsel %vm632, %v660, 0
        %670 = vmatprep.subr.mxu0 0.0
        %671 = vmatpush1.msra.mxu0 0.0
        %672 = vmatprep.subr.mxu0 0.0
        %673 = vmatpush1.msra.mxu0 0.0
        %674 = vmatprep.subr.mxu0 0.0
        %675 = vmatpush1.msra.mxu0 0.0
        %676 = vmatprep.subr.mxu0 0.0
        %677 = vmatpush1.msra.mxu0 0.0
        %678 = vmatprep.subr.mxu0 0.0
        %679 = vmatpush1.msra.mxu0 0.0
        %680 = vmatprep.subr.mxu0 0.0
        %681 = vmatpush1.msra.mxu0 0.0
        %682 = vmatprep.subr.mxu0 0.0
        %683 = vmatpush1.msra.mxu0 0.0
        %684 = vmatprep.subr.mxu0 0.0
        %685 = vmatpush1.msra.mxu0 0.0
        %686 = vmatprep.subr.mxu0 0.0
        %687 = vmatpush1.msra.mxu0 0.0
        %688 = vmatprep.subr.mxu0 0.0
        %689 = vmatpush1.msra.mxu0 0.0
        %690 = vmatprep.subr.mxu0 0.0
        %691 = vmatpush1.msra.mxu0 0.0
        %692 = vmatprep.subr.mxu0 0.0
        %693 = vmatpush1.msra.mxu0 0.0
        %694 = vmatprep.subr.mxu0 0.0
        %695 = vmatpush1.msra.mxu0 %v600
        %696 = vmatprep.subr.mxu0 0.0
        %697 = vmatpush1.msra.mxu0 %v599
        %698 = vmatprep.subr.mxu0 0.0
        %699 = vmatpush1.msra.mxu0 %v598
        %700 = vmatprep.subr.mxu0 0.0
        %701 = vmatpush1.msra.mxu0 %v597
        %702 = vmatprep.subr.mxu0 0.0
        %703 = vmatpush2.msra.mxu0 0.0
        %704 = vmatprep.subr.mxu0 0.0
        %705 = vmatpush2.msra.mxu0 0.0
        %706 = vmatprep.subr.mxu0 0.0
        %707 = vmatpush2.msra.mxu0 0.0
        %708 = vmatprep.subr.mxu0 0.0
        %709 = vmatpush2.msra.mxu0 0.0
        %710 = vmatprep.subr.mxu0 0.0
        %711 = vmatpush2.msra.mxu0 0.0
        %712 = vmatprep.subr.mxu0 0.0
        %713 = vmatpush2.msra.mxu0 0.0
        %714 = vmatprep.subr.mxu0 0.0
        %715 = vmatpush2.msra.mxu0 0.0
        %716 = vmatprep.subr.mxu0 0.0
        %717 = vmatpush2.msra.mxu0 0.0
        %718 = vmatprep.subr.mxu0 0.0
        %719 = vmatpush2.msra.mxu0 0.0
        %720 = vmatprep.subr.mxu0 0.0
        %721 = vmatpush2.msra.mxu0 0.0
        %722 = vmatprep.subr.mxu0 0.0
        %723 = vmatpush2.msra.mxu0 0.0
        %724 = vmatprep.subr.mxu0 0.0
        %725 = vmatpush2.msra.mxu0 0.0
        %726 = vmatprep.subr.mxu0 0.0
        %727 = vmatpush2.msra.mxu0 0.0
        %728 = vmatprep.subr.mxu0 0.0
        %729 = vmatpush2.msra.mxu0 0.0
        %730 = vmatprep.subr.mxu0 0.0
        %731 = vmatpush2.msra.mxu0 0.0
        %732 = vmatprep.subr.mxu0 0.0
        %733 = vmatpush2.msra.mxu0 0.0
        %734 = vmatprep.mubr.f32.mxu0 0.0
        %735 = vmatmul.mubr.f32.gmra.mxu0 %v668
        %v736 = vpop.f32.mrf.mxu0
        %v737 = vadd.f32 %v665, %v736
        %v738 = vpop.f32.mrf.mxu0
        %739 = vdwg.mxu0
        %v741 = vlaneseq
        %v742 = vshrl.u32 %v741, 7
        %v743 = vsub.s32 0, %v742
        %v744 = vrot.slane %v606, %v743
        %746 = vmatprep.subr.mxu0 0.0
        %747 = vmatpush1.msra.mxu0 0.0
        %748 = vmatprep.subr.mxu0 0.0
        %749 = vmatpush1.msra.mxu0 0.0
        %750 = vmatprep.subr.mxu0 0.0
        %751 = vmatpush1.msra.mxu0 0.0
        %752 = vmatprep.subr.mxu0 0.0
        %753 = vmatpush1.msra.mxu0 0.0
        %754 = vmatprep.subr.mxu0 0.0
        %755 = vmatpush1.msra.mxu0 0.0
        %756 = vmatprep.subr.mxu0 0.0
        %757 = vmatpush1.msra.mxu0 0.0
        %758 = vmatprep.subr.mxu0 0.0
        %759 = vmatpush1.msra.mxu0 0.0
        %760 = vmatprep.subr.mxu0 0.0
        %761 = vmatpush1.msra.mxu0 0.0
        %762 = vmatprep.subr.mxu0 0.0
        %763 = vmatpush1.msra.mxu0 0.0
        %764 = vmatprep.subr.mxu0 0.0
        %765 = vmatpush1.msra.mxu0 0.0
        %766 = vmatprep.subr.mxu0 0.0
        %767 = vmatpush1.msra.mxu0 0.0
        %768 = vmatprep.subr.mxu0 0.0
        %769 = vmatpush1.msra.mxu0 0.0
        %770 = vmatprep.subr.mxu0 0.0
        %771 = vmatpush1.msra.mxu0 %v605
        %772 = vmatprep.subr.mxu0 0.0
        %773 = vmatpush1.msra.mxu0 %v604
        %774 = vmatprep.subr.mxu0 0.0
        %775 = vmatpush1.msra.mxu0 %v603
        %776 = vmatprep.subr.mxu0 0.0
        %777 = vmatpush1.msra.mxu0 %v602
        %778 = vmatprep.subr.mxu0 0.0
        %779 = vmatpush2.msra.mxu0 0.0
        %780 = vmatprep.subr.mxu0 0.0
        %781 = vmatpush2.msra.mxu0 0.0
        %782 = vmatprep.subr.mxu0 0.0
        %783 = vmatpush2.msra.mxu0 0.0
        %784 = vmatprep.subr.mxu0 0.0
        %785 = vmatpush2.msra.mxu0 0.0
        %786 = vmatprep.subr.mxu0 0.0
        %787 = vmatpush2.msra.mxu0 0.0
        %788 = vmatprep.subr.mxu0 0.0
        %789 = vmatpush2.msra.mxu0 0.0
        %790 = vmatprep.subr.mxu0 0.0
        %791 = vmatpush2.msra.mxu0 0.0
        %792 = vmatprep.subr.mxu0 0.0
        %793 = vmatpush2.msra.mxu0 0.0
        %794 = vmatprep.subr.mxu0 0.0
        %795 = vmatpush2.msra.mxu0 0.0
        %796 = vmatprep.subr.mxu0 0.0
        %797 = vmatpush2.msra.mxu0 0.0
        %798 = vmatprep.subr.mxu0 0.0
        %799 = vmatpush2.msra.mxu0 0.0
        %800 = vmatprep.subr.mxu0 0.0
        %801 = vmatpush2.msra.mxu0 0.0
        %802 = vmatprep.subr.mxu0 0.0
        %803 = vmatpush2.msra.mxu0 0.0
        %804 = vmatprep.subr.mxu0 0.0
        %805 = vmatpush2.msra.mxu0 0.0
        %806 = vmatprep.subr.mxu0 0.0
        %807 = vmatpush2.msra.mxu0 0.0
        %808 = vmatprep.subr.mxu0 0.0
        %809 = vmatpush2.msra.mxu0 0.0
        %810 = vmatprep.mubr.f32.mxu0 0.0
        %811 = vmatmul.mubr.f32.gmra.mxu0 %v668
        %v812 = vpop.f32.mrf.mxu0
        %v813 = vadd.f32 %v744, %v812
        %v814 = vpop.f32.mrf.mxu0
        %815 = vdwg.mxu0
        %v817 = vlaneseq
        %v818 = vshrl.u32 %v817, 7
        %v819 = vsub.s32 0, %v818
        %v820 = vrot.slane %v611, %v819
        %822 = vmatprep.subr.mxu0 0.0
        %823 = vmatpush1.msra.mxu0 0.0
        %824 = vmatprep.subr.mxu0 0.0
        %825 = vmatpush1.msra.mxu0 0.0
        %826 = vmatprep.subr.mxu0 0.0
        %827 = vmatpush1.msra.mxu0 0.0
        %828 = vmatprep.subr.mxu0 0.0
        %829 = vmatpush1.msra.mxu0 0.0
        %830 = vmatprep.subr.mxu0 0.0
        %831 = vmatpush1.msra.mxu0 0.0
        %832 = vmatprep.subr.mxu0 0.0
        %833 = vmatpush1.msra.mxu0 0.0
        %834 = vmatprep.subr.mxu0 0.0
        %835 = vmatpush1.msra.mxu0 0.0
        %836 = vmatprep.subr.mxu0 0.0
        %837 = vmatpush1.msra.mxu0 0.0
        %838 = vmatprep.subr.mxu0 0.0
        %839 = vmatpush1.msra.mxu0 0.0
        %840 = vmatprep.subr.mxu0 0.0
        %841 = vmatpush1.msra.mxu0 0.0
        %842 = vmatprep.subr.mxu0 0.0
        %843 = vmatpush1.msra.mxu0 0.0
        %844 = vmatprep.subr.mxu0 0.0
        %845 = vmatpush1.msra.mxu0 0.0
        %846 = vmatprep.subr.mxu0 0.0
        %847 = vmatpush1.msra.mxu0 %v610
        %848 = vmatprep.subr.mxu0 0.0
        %849 = vmatpush1.msra.mxu0 %v609
        %850 = vmatprep.subr.mxu0 0.0
        %851 = vmatpush1.msra.mxu0 %v608
        %852 = vmatprep.subr.mxu0 0.0
        %853 = vmatpush1.msra.mxu0 %v607
        %854 = vmatprep.subr.mxu0 0.0
        %855 = vmatpush2.msra.mxu0 0.0
        %856 = vmatprep.subr.mxu0 0.0
        %857 = vmatpush2.msra.mxu0 0.0
        %858 = vmatprep.subr.mxu0 0.0
        %859 = vmatpush2.msra.mxu0 0.0
        %860 = vmatprep.subr.mxu0 0.0
        %861 = vmatpush2.msra.mxu0 0.0
        %862 = vmatprep.subr.mxu0 0.0
        %863 = vmatpush2.msra.mxu0 0.0
        %864 = vmatprep.subr.mxu0 0.0
        %865 = vmatpush2.msra.mxu0 0.0
        %866 = vmatprep.subr.mxu0 0.0
        %867 = vmatpush2.msra.mxu0 0.0
        %868 = vmatprep.subr.mxu0 0.0
        %869 = vmatpush2.msra.mxu0 0.0
        %870 = vmatprep.subr.mxu0 0.0
        %871 = vmatpush2.msra.mxu0 0.0
        %872 = vmatprep.subr.mxu0 0.0
        %873 = vmatpush2.msra.mxu0 0.0
        %874 = vmatprep.subr.mxu0 0.0
        %875 = vmatpush2.msra.mxu0 0.0
        %876 = vmatprep.subr.mxu0 0.0
        %877 = vmatpush2.msra.mxu0 0.0
        %878 = vmatprep.subr.mxu0 0.0
        %879 = vmatpush2.msra.mxu0 0.0
        %880 = vmatprep.subr.mxu0 0.0
        %881 = vmatpush2.msra.mxu0 0.0
        %882 = vmatprep.subr.mxu0 0.0
        %883 = vmatpush2.msra.mxu0 0.0
        %884 = vmatprep.subr.mxu0 0.0
        %885 = vmatpush2.msra.mxu0 0.0
        %886 = vmatprep.mubr.f32.mxu0 0.0
        %887 = vmatmul.mubr.f32.gmra.mxu0 %v668
        %v888 = vpop.f32.mrf.mxu0
        %v889 = vadd.f32 %v820, %v888
        %v890 = vpop.f32.mrf.mxu0
        %891 = vdwg.mxu0
        %vm892 = vcmask 64512
        %v894 = vsel %vm892, %v737, 0
        %v897 = vsel %vm892, %v813, 0
        %899 = vmatprep.subr.mxu0 0.0
        %900 = vmatpush1.xpose.msra.mxu0 0.0
        %901 = vmatprep.subr.mxu0 0.0
        %902 = vmatpush1.xpose.msra.mxu0 0.0
        %903 = vmatprep.subr.mxu0 0.0
        %904 = vmatpush1.xpose.msra.mxu0 0.0
        %905 = vmatprep.subr.mxu0 0.0
        %906 = vmatpush1.xpose.msra.mxu0 0.0
        %907 = vmatprep.subr.mxu0 0.0
        %908 = vmatpush1.xpose.msra.mxu0 0.0
        %909 = vmatprep.subr.mxu0 0.0
        %910 = vmatpush1.xpose.msra.mxu0 0.0
        %911 = vmatprep.subr.mxu0 0.0
        %912 = vmatpush1.xpose.msra.mxu0 0.0
        %913 = vmatprep.subr.mxu0 0.0
        %914 = vmatpush1.xpose.msra.mxu0 0.0
        %915 = vmatprep.subr.mxu0 0.0
        %916 = vmatpush1.xpose.msra.mxu0 0.0
        %917 = vmatprep.subr.mxu0 0.0
        %918 = vmatpush1.xpose.msra.mxu0 0.0
        %919 = vmatprep.subr.mxu0 0.0
        %920 = vmatpush1.xpose.msra.mxu0 0.0
        %921 = vmatprep.subr.mxu0 0.0
        %922 = vmatpush1.xpose.msra.mxu0 0.0
        %923 = vmatprep.subr.mxu0 0.0
        %924 = vmatpush1.xpose.msra.mxu0 0.0
        %925 = vmatprep.subr.mxu0 0.0
        %926 = vmatpush1.xpose.msra.mxu0 0.0
        %927 = vmatprep.subr.mxu0 0.0
        %928 = vmatpush1.xpose.msra.mxu0 0.0
        %929 = vmatprep.subr.mxu0 0.0
        %930 = vmatpush1.xpose.msra.mxu0 %v897
        %931 = vmatprep.subr.mxu0 0.0
        %932 = vmatpush2.xpose.msra.mxu0 0.0
        %933 = vmatprep.subr.mxu0 0.0
        %934 = vmatpush2.xpose.msra.mxu0 0.0
        %935 = vmatprep.subr.mxu0 0.0
        %936 = vmatpush2.xpose.msra.mxu0 0.0
        %937 = vmatprep.subr.mxu0 0.0
        %938 = vmatpush2.xpose.msra.mxu0 0.0
        %939 = vmatprep.subr.mxu0 0.0
        %940 = vmatpush2.xpose.msra.mxu0 0.0
        %941 = vmatprep.subr.mxu0 0.0
        %942 = vmatpush2.xpose.msra.mxu0 0.0
        %943 = vmatprep.subr.mxu0 0.0
        %944 = vmatpush2.xpose.msra.mxu0 0.0
        %945 = vmatprep.subr.mxu0 0.0
        %946 = vmatpush2.xpose.msra.mxu0 0.0
        %947 = vmatprep.subr.mxu0 0.0
        %948 = vmatpush2.xpose.msra.mxu0 0.0
        %949 = vmatprep.subr.mxu0 0.0
        %950 = vmatpush2.xpose.msra.mxu0 0.0
        %951 = vmatprep.subr.mxu0 0.0
        %952 = vmatpush2.xpose.msra.mxu0 0.0
        %953 = vmatprep.subr.mxu0 0.0
        %954 = vmatpush2.xpose.msra.mxu0 0.0
        %955 = vmatprep.subr.mxu0 0.0
        %956 = vmatpush2.xpose.msra.mxu0 0.0
        %957 = vmatprep.subr.mxu0 0.0
        %958 = vmatpush2.xpose.msra.mxu0 0.0
        %959 = vmatprep.subr.mxu0 0.0
        %960 = vmatpush2.xpose.msra.mxu0 0.0
        %961 = vmatprep.subr.mxu0 0.0
        %962 = vmatpush2.xpose.msra.mxu0 0.0
        %963 = vmatprep.mubr.f32.mxu0 0.0
        %964 = vmatmul.mubr.f32.gmra.mxu0 %v894
        %v965 = vpop.f32.mrf.mxu0
        %v966 = vadd.f32 0.0, %v965
        %v967 = vpop.f32.mrf.mxu0
        %968 = vdwg.mxu0
        %v969 = vmul.f32 %v966, 0.35355338
        %v970 = vsel %vm892, %v969, -inf
        %971 = vmax.xlane.f32.xlu0 %v970
        %v972 = vpop.xlane.xlu0 %971
        %v973 = vsub.f32 %v969, %v972
        %v974 = vmul.f32 %v973, 1.442695
        %v975 = vpow.pop %v974
        %v976 = vsel %vm892, %v975, 0.0
        %977 = vadd.xlane.f32.xlu0 %v976
        %v978 = vpop.xlane.xlu0 %977
        %v979 = vrcp.pop %v978
        %v980 = vmul.f32 %v975, %v979
        %v982 = vsel %vm892, %v980, 0
        %984 = vmatprep.subr.mxu0 0.0
        %985 = vmatpush1.msra.mxu0 0.0
        %986 = vmatprep.subr.mxu0 0.0
        %987 = vmatpush1.msra.mxu0 0.0
        %988 = vmatprep.subr.mxu0 0.0
        %989 = vmatpush1.msra.mxu0 0.0
        %990 = vmatprep.subr.mxu0 0.0
        %991 = vmatpush1.msra.mxu0 0.0
        %992 = vmatprep.subr.mxu0 0.0
        %993 = vmatpush1.msra.mxu0 0.0
        %994 = vmatprep.subr.mxu0 0.0
        %995 = vmatpush1.msra.mxu0 0.0
        %996 = vmatprep.subr.mxu0 0.0
        %997 = vmatpush1.msra.mxu0 0.0
        %998 = vmatprep.subr.mxu0 0.0
        %999 = vmatpush1.msra.mxu0 0.0
        %1000 = vmatprep.subr.mxu0 0.0
        %1001 = vmatpush1.msra.mxu0 0.0
        %1002 = vmatprep.subr.mxu0 0.0
        %1003 = vmatpush1.msra.mxu0 0.0
        %1004 = vmatprep.subr.mxu0 0.0
        %1005 = vmatpush1.msra.mxu0 0.0
        %1006 = vmatprep.subr.mxu0 0.0
        %1007 = vmatpush1.msra.mxu0 0.0
        %1008 = vmatprep.subr.mxu0 0.0
        %1009 = vmatpush1.msra.mxu0 0.0
        %1010 = vmatprep.subr.mxu0 0.0
        %1011 = vmatpush1.msra.mxu0 0.0
        %1012 = vmatprep.subr.mxu0 0.0
        %1013 = vmatpush1.msra.mxu0 0.0
        %1014 = vmatprep.subr.mxu0 0.0
        %1015 = vmatpush1.msra.mxu0 %v889
        %1016 = vmatprep.subr.mxu0 0.0
        %1017 = vmatpush2.msra.mxu0 0.0
        %1018 = vmatprep.subr.mxu0 0.0
        %1019 = vmatpush2.msra.mxu0 0.0
        %1020 = vmatprep.subr.mxu0 0.0
        %1021 = vmatpush2.msra.mxu0 0.0
        %1022 = vmatprep.subr.mxu0 0.0
        %1023 = vmatpush2.msra.mxu0 0.0
        %1024 = vmatprep.subr.mxu0 0.0
        %1025 = vmatpush2.msra.mxu0 0.0
        %1026 = vmatprep.subr.mxu0 0.0
        %1027 = vmatpush2.msra.mxu0 0.0
        %1028 = vmatprep.subr.mxu0 0.0
        %1029 = vmatpush2.msra.mxu0 0.0
        %1030 = vmatprep.subr.mxu0 0.0
        %1031 = vmatpush2.msra.mxu0 0.0
        %1032 = vmatprep.subr.mxu0 0.0
        %1033 = vmatpush2.msra.mxu0 0.0
        %1034 = vmatprep.subr.mxu0 0.0
        %1035 = vmatpush2.msra.mxu0 0.0
        %1036 = vmatprep.subr.mxu0 0.0
        %1037 = vmatpush2.msra.mxu0 0.0
        %1038 = vmatprep.subr.mxu0 0.0
        %1039 = vmatpush2.msra.mxu0 0.0
        %1040 = vmatprep.subr.mxu0 0.0
        %1041 = vmatpush2.msra.mxu0 0.0
        %1042 = vmatprep.subr.mxu0 0.0
        %1043 = vmatpush2.msra.mxu0 0.0
        %1044 = vmatprep.subr.mxu0 0.0
        %1045 = vmatpush2.msra.mxu0 0.0
        %1046 = vmatprep.subr.mxu0 0.0
        %1047 = vmatpush2.msra.mxu0 0.0
        %1048 = vmatprep.mubr.f32.mxu0 0.0
        %1049 = vmatmul.mubr.f32.gmra.mxu0 %v982
        %v1050 = vpop.f32.mrf.mxu0
        %v1051 = vadd.f32 0.0, %v1050
        %v1052 = vpop.f32.mrf.mxu0
        %1053 = vdwg.mxu0
        %1054 = vrot.lane.b32.xlu0 %v737, 120
        %v1055 = vpop.permute.xlu0 %1054
        %1056 = vrot.lane.b32.xlu0 %v813, 120
        %v1057 = vpop.permute.xlu0 %1056
        %v1058 = vsel %vm892, %v1055, 0
        %v1060 = vsel %vm892, %v1057, 0
        %1062 = vmatprep.subr.mxu0 0.0
        %1063 = vmatpush1.xpose.msra.mxu0 0.0
        %1064 = vmatprep.subr.mxu0 0.0
        %1065 = vmatpush1.xpose.msra.mxu0 0.0
        %1066 = vmatprep.subr.mxu0 0.0
        %1067 = vmatpush1.xpose.msra.mxu0 0.0
        %1068 = vmatprep.subr.mxu0 0.0
        %1069 = vmatpush1.xpose.msra.mxu0 0.0
        %1070 = vmatprep.subr.mxu0 0.0
        %1071 = vmatpush1.xpose.msra.mxu0 0.0
        %1072 = vmatprep.subr.mxu0 0.0
        %1073 = vmatpush1.xpose.msra.mxu0 0.0
        %1074 = vmatprep.subr.mxu0 0.0
        %1075 = vmatpush1.xpose.msra.mxu0 0.0
        %1076 = vmatprep.subr.mxu0 0.0
        %1077 = vmatpush1.xpose.msra.mxu0 0.0
        %1078 = vmatprep.subr.mxu0 0.0
        %1079 = vmatpush1.xpose.msra.mxu0 0.0
        %1080 = vmatprep.subr.mxu0 0.0
        %1081 = vmatpush1.xpose.msra.mxu0 0.0
        %1082 = vmatprep.subr.mxu0 0.0
        %1083 = vmatpush1.xpose.msra.mxu0 0.0
        %1084 = vmatprep.subr.mxu0 0.0
        %1085 = vmatpush1.xpose.msra.mxu0 0.0
        %1086 = vmatprep.subr.mxu0 0.0
        %1087 = vmatpush1.xpose.msra.mxu0 0.0
        %1088 = vmatprep.subr.mxu0 0.0
        %1089 = vmatpush1.xpose.msra.mxu0 0.0
        %1090 = vmatprep.subr.mxu0 0.0
        %1091 = vmatpush1.xpose.msra.mxu0 0.0
        %1092 = vmatprep.subr.mxu0 0.0
        %1093 = vmatpush1.xpose.msra.mxu0 %v1060
        %1094 = vmatprep.subr.mxu0 0.0
        %1095 = vmatpush2.xpose.msra.mxu0 0.0
        %1096 = vmatprep.subr.mxu0 0.0
        %1097 = vmatpush2.xpose.msra.mxu0 0.0
        %1098 = vmatprep.subr.mxu0 0.0
        %1099 = vmatpush2.xpose.msra.mxu0 0.0
        %1100 = vmatprep.subr.mxu0 0.0
        %1101 = vmatpush2.xpose.msra.mxu0 0.0
        %1102 = vmatprep.subr.mxu0 0.0
        %1103 = vmatpush2.xpose.msra.mxu0 0.0
        %1104 = vmatprep.subr.mxu0 0.0
        %1105 = vmatpush2.xpose.msra.mxu0 0.0
        %1106 = vmatprep.subr.mxu0 0.0
        %1107 = vmatpush2.xpose.msra.mxu0 0.0
        %1108 = vmatprep.subr.mxu0 0.0
        %1109 = vmatpush2.xpose.msra.mxu0 0.0
        %1110 = vmatprep.subr.mxu0 0.0
        %1111 = vmatpush2.xpose.msra.mxu0 0.0
        %1112 = vmatprep.subr.mxu0 0.0
        %1113 = vmatpush2.xpose.msra.mxu0 0.0
        %1114 = vmatprep.subr.mxu0 0.0
        %1115 = vmatpush2.xpose.msra.mxu0 0.0
        %1116 = vmatprep.subr.mxu0 0.0
        %1117 = vmatpush2.xpose.msra.mxu0 0.0
        %1118 = vmatprep.subr.mxu0 0.0
        %1119 = vmatpush2.xpose.msra.mxu0 0.0
        %1120 = vmatprep.subr.mxu0 0.0
        %1121 = vmatpush2.xpose.msra.mxu0 0.0
        %1122 = vmatprep.subr.mxu0 0.0
        %1123 = vmatpush2.xpose.msra.mxu0 0.0
        %1124 = vmatprep.subr.mxu0 0.0
        %1125 = vmatpush2.xpose.msra.mxu0 0.0
        %1126 = vmatprep.mubr.f32.mxu0 0.0
        %1127 = vmatmul.mubr.f32.gmra.mxu0 %v1058
        %v1128 = vpop.f32.mrf.mxu0
        %v1129 = vadd.f32 0.0, %v1128
        %v1130 = vpop.f32.mrf.mxu0
        %1131 = vdwg.mxu0
        %v1132 = vmul.f32 %v1129, 0.35355338
        %v1133 = vsel %vm892, %v1132, -inf
        %1134 = vmax.xlane.f32.xlu0 %v1133
        %v1135 = vpop.xlane.xlu0 %1134
        %v1136 = vsub.f32 %v1132, %v1135
        %v1137 = vmul.f32 %v1136, 1.442695
        %v1138 = vpow.pop %v1137
        %v1139 = vsel %vm892, %v1138, 0.0
        %1140 = vadd.xlane.f32.xlu0 %v1139
        %v1141 = vpop.xlane.xlu0 %1140
        %v1142 = vrcp.pop %v1141
        %v1143 = vmul.f32 %v1138, %v1142
        %1145 = vrot.lane.b32.xlu0 %v889, 120
        %v1146 = vpop.permute.xlu0 %1145
        %v1149 = vsel %vm892, %v1143, 0
        %1151 = vmatprep.subr.mxu0 0.0
        %1152 = vmatpush1.msra.mxu0 0.0
        %1153 = vmatprep.subr.mxu0 0.0
        %1154 = vmatpush1.msra.mxu0 0.0
        %1155 = vmatprep.subr.mxu0 0.0
        %1156 = vmatpush1.msra.mxu0 0.0
        %1157 = vmatprep.subr.mxu0 0.0
        %1158 = vmatpush1.msra.mxu0 0.0
        %1159 = vmatprep.subr.mxu0 0.0
        %1160 = vmatpush1.msra.mxu0 0.0
        %1161 = vmatprep.subr.mxu0 0.0
        %1162 = vmatpush1.msra.mxu0 0.0
        %1163 = vmatprep.subr.mxu0 0.0
        %1164 = vmatpush1.msra.mxu0 0.0
        %1165 = vmatprep.subr.mxu0 0.0
        %1166 = vmatpush1.msra.mxu0 0.0
        %1167 = vmatprep.subr.mxu0 0.0
        %1168 = vmatpush1.msra.mxu0 0.0
        %1169 = vmatprep.subr.mxu0 0.0
        %1170 = vmatpush1.msra.mxu0 0.0
        %1171 = vmatprep.subr.mxu0 0.0
        %1172 = vmatpush1.msra.mxu0 0.0
        %1173 = vmatprep.subr.mxu0 0.0
        %1174 = vmatpush1.msra.mxu0 0.0
        %1175 = vmatprep.subr.mxu0 0.0
        %1176 = vmatpush1.msra.mxu0 0.0
        %1177 = vmatprep.subr.mxu0 0.0
        %1178 = vmatpush1.msra.mxu0 0.0
        %1179 = vmatprep.subr.mxu0 0.0
        %1180 = vmatpush1.msra.mxu0 0.0
        %1181 = vmatprep.subr.mxu0 0.0
        %1182 = vmatpush1.msra.mxu0 %v1146
        %1183 = vmatprep.subr.mxu0 0.0
        %1184 = vmatpush2.msra.mxu0 0.0
        %1185 = vmatprep.subr.mxu0 0.0
        %1186 = vmatpush2.msra.mxu0 0.0
        %1187 = vmatprep.subr.mxu0 0.0
        %1188 = vmatpush2.msra.mxu0 0.0
        %1189 = vmatprep.subr.mxu0 0.0
        %1190 = vmatpush2.msra.mxu0 0.0
        %1191 = vmatprep.subr.mxu0 0.0
        %1192 = vmatpush2.msra.mxu0 0.0
        %1193 = vmatprep.subr.mxu0 0.0
        %1194 = vmatpush2.msra.mxu0 0.0
        %1195 = vmatprep.subr.mxu0 0.0
        %1196 = vmatpush2.msra.mxu0 0.0
        %1197 = vmatprep.subr.mxu0 0.0
        %1198 = vmatpush2.msra.mxu0 0.0
        %1199 = vmatprep.subr.mxu0 0.0
        %1200 = vmatpush2.msra.mxu0 0.0
        %1201 = vmatprep.subr.mxu0 0.0
        %1202 = vmatpush2.msra.mxu0 0.0
        %1203 = vmatprep.subr.mxu0 0.0
        %1204 = vmatpush2.msra.mxu0 0.0
        %1205 = vmatprep.subr.mxu0 0.0
        %1206 = vmatpush2.msra.mxu0 0.0
        %1207 = vmatprep.subr.mxu0 0.0
        %1208 = vmatpush2.msra.mxu0 0.0
        %1209 = vmatprep.subr.mxu0 0.0
        %1210 = vmatpush2.msra.mxu0 0.0
        %1211 = vmatprep.subr.mxu0 0.0
        %1212 = vmatpush2.msra.mxu0 0.0
        %1213 = vmatprep.subr.mxu0 0.0
        %1214 = vmatpush2.msra.mxu0 0.0
        %1215 = vmatprep.mubr.f32.mxu0 0.0
        %1216 = vmatmul.mubr.f32.gmra.mxu0 %v1149
        %v1217 = vpop.f32.mrf.mxu0
        %v1218 = vadd.f32 0.0, %v1217
        %v1219 = vpop.f32.mrf.mxu0
        %1220 = vdwg.mxu0
        %v1222 = vsel %vm892, %v1218, 0
        %1224 = vmatprep.subr.mxu0 0.0
        %1225 = vmatpush1.msra.mxu0 0.0
        %1226 = vmatprep.subr.mxu0 0.0
        %1227 = vmatpush1.msra.mxu0 0.0
        %1228 = vmatprep.subr.mxu0 0.0
        %1229 = vmatpush1.msra.mxu0 0.0
        %1230 = vmatprep.subr.mxu0 0.0
        %1231 = vmatpush1.msra.mxu0 0.0
        %1232 = vmatprep.subr.mxu0 0.0
        %1233 = vmatpush1.msra.mxu0 0.0
        %1234 = vmatprep.subr.mxu0 0.0
        %1235 = vmatpush1.msra.mxu0 0.0
        %1236 = vmatprep.subr.mxu0 0.0
        %1237 = vmatpush1.msra.mxu0 0.0
        %1238 = vmatprep.subr.mxu0 0.0
        %1239 = vmatpush1.msra.mxu0 0.0
        %1240 = vmatprep.subr.mxu0 0.0
        %1241 = vmatpush1.msra.mxu0 0.0
        %1242 = vmatprep.subr.mxu0 0.0
        %1243 = vmatpush1.msra.mxu0 0.0
        %1244 = vmatprep.subr.mxu0 0.0
        %1245 = vmatpush1.msra.mxu0 0.0
        %1246 = vmatprep.subr.mxu0 0.0
        %1247 = vmatpush1.msra.mxu0 0.0
        %1248 = vmatprep.subr.mxu0 0.0
        %1249 = vmatpush1.msra.mxu0 0.0
        %1250 = vmatprep.subr.mxu0 0.0
        %1251 = vmatpush1.msra.mxu0 0.0
        %1252 = vmatprep.subr.mxu0 0.0
        %1253 = vmatpush1.msra.mxu0 0.0
        %1254 = vmatprep.subr.mxu0 0.0
        %1255 = vmatpush1.msra.mxu0 %v613
        %1256 = vmatprep.subr.mxu0 0.0
        %1257 = vmatpush2.msra.mxu0 0.0
        %1258 = vmatprep.subr.mxu0 0.0
        %1259 = vmatpush2.msra.mxu0 0.0
        %1260 = vmatprep.subr.mxu0 0.0
        %1261 = vmatpush2.msra.mxu0 0.0
        %1262 = vmatprep.subr.mxu0 0.0
        %1263 = vmatpush2.msra.mxu0 0.0
        %1264 = vmatprep.subr.mxu0 0.0
        %1265 = vmatpush2.msra.mxu0 0.0
        %1266 = vmatprep.subr.mxu0 0.0
        %1267 = vmatpush2.msra.mxu0 0.0
        %1268 = vmatprep.subr.mxu0 0.0
        %1269 = vmatpush2.msra.mxu0 0.0
        %1270 = vmatprep.subr.mxu0 0.0
        %1271 = vmatpush2.msra.mxu0 0.0
        %1272 = vmatprep.subr.mxu0 0.0
        %1273 = vmatpush2.msra.mxu0 0.0
        %1274 = vmatprep.subr.mxu0 0.0
        %1275 = vmatpush2.msra.mxu0 0.0
        %1276 = vmatprep.subr.mxu0 0.0
        %1277 = vmatpush2.msra.mxu0 0.0
        %1278 = vmatprep.subr.mxu0 0.0
        %1279 = vmatpush2.msra.mxu0 0.0
        %1280 = vmatprep.subr.mxu0 0.0
        %1281 = vmatpush2.msra.mxu0 0.0
        %1282 = vmatprep.subr.mxu0 0.0
        %1283 = vmatpush2.msra.mxu0 0.0
        %1284 = vmatprep.subr.mxu0 0.0
        %1285 = vmatpush2.msra.mxu0 0.0
        %1286 = vmatprep.subr.mxu0 0.0
        %1287 = vmatpush2.msra.mxu0 0.0
        %1288 = vmatprep.mubr.f32.mxu0 0.0
        %1289 = vmatmul.mubr.f32.gmra.mxu0 %v1222
        %v1290 = vpop.f32.mrf.mxu0
        %v1291 = vadd.f32 0.0, %v1290
        %v1292 = vpop.f32.mrf.mxu0
        %1293 = vdwg.mxu0
        %v1295 = vsel %vm892, %v1051, 0
        %1297 = vmatprep.subr.mxu0 0.0
        %1298 = vmatpush1.msra.mxu0 0.0
        %1299 = vmatprep.subr.mxu0 0.0
        %1300 = vmatpush1.msra.mxu0 0.0
        %1301 = vmatprep.subr.mxu0 0.0
        %1302 = vmatpush1.msra.mxu0 0.0
        %1303 = vmatprep.subr.mxu0 0.0
        %1304 = vmatpush1.msra.mxu0 0.0
        %1305 = vmatprep.subr.mxu0 0.0
        %1306 = vmatpush1.msra.mxu0 0.0
        %1307 = vmatprep.subr.mxu0 0.0
        %1308 = vmatpush1.msra.mxu0 0.0
        %1309 = vmatprep.subr.mxu0 0.0
        %1310 = vmatpush1.msra.mxu0 0.0
        %1311 = vmatprep.subr.mxu0 0.0
        %1312 = vmatpush1.msra.mxu0 0.0
        %1313 = vmatprep.subr.mxu0 0.0
        %1314 = vmatpush1.msra.mxu0 0.0
        %1315 = vmatprep.subr.mxu0 0.0
        %1316 = vmatpush1.msra.mxu0 0.0
        %1317 = vmatprep.subr.mxu0 0.0
        %1318 = vmatpush1.msra.mxu0 0.0
        %1319 = vmatprep.subr.mxu0 0.0
        %1320 = vmatpush1.msra.mxu0 0.0
        %1321 = vmatprep.subr.mxu0 0.0
        %1322 = vmatpush1.msra.mxu0 0.0
        %1323 = vmatprep.subr.mxu0 0.0
        %1324 = vmatpush1.msra.mxu0 0.0
        %1325 = vmatprep.subr.mxu0 0.0
        %1326 = vmatpush1.msra.mxu0 0.0
        %1327 = vmatprep.subr.mxu0 0.0
        %1328 = vmatpush1.msra.mxu0 %v612
        %1329 = vmatprep.subr.mxu0 0.0
        %1330 = vmatpush2.msra.mxu0 0.0
        %1331 = vmatprep.subr.mxu0 0.0
        %1332 = vmatpush2.msra.mxu0 0.0
        %1333 = vmatprep.subr.mxu0 0.0
        %1334 = vmatpush2.msra.mxu0 0.0
        %1335 = vmatprep.subr.mxu0 0.0
        %1336 = vmatpush2.msra.mxu0 0.0
        %1337 = vmatprep.subr.mxu0 0.0
        %1338 = vmatpush2.msra.mxu0 0.0
        %1339 = vmatprep.subr.mxu0 0.0
        %1340 = vmatpush2.msra.mxu0 0.0
        %1341 = vmatprep.subr.mxu0 0.0
        %1342 = vmatpush2.msra.mxu0 0.0
        %1343 = vmatprep.subr.mxu0 0.0
        %1344 = vmatpush2.msra.mxu0 0.0
        %1345 = vmatprep.subr.mxu0 0.0
        %1346 = vmatpush2.msra.mxu0 0.0
        %1347 = vmatprep.subr.mxu0 0.0
        %1348 = vmatpush2.msra.mxu0 0.0
        %1349 = vmatprep.subr.mxu0 0.0
        %1350 = vmatpush2.msra.mxu0 0.0
        %1351 = vmatprep.subr.mxu0 0.0
        %1352 = vmatpush2.msra.mxu0 0.0
        %1353 = vmatprep.subr.mxu0 0.0
        %1354 = vmatpush2.msra.mxu0 0.0
        %1355 = vmatprep.subr.mxu0 0.0
        %1356 = vmatpush2.msra.mxu0 0.0
        %1357 = vmatprep.subr.mxu0 0.0
        %1358 = vmatpush2.msra.mxu0 0.0
        %1359 = vmatprep.subr.mxu0 0.0
        %1360 = vmatpush2.msra.mxu0 0.0
        %1361 = vmatprep.mubr.f32.mxu0 0.0
        %1362 = vmatmul.mubr.f32.gmra.mxu0 %v1295
        %v1363 = vpop.f32.mrf.mxu0
        %v1364 = vadd.f32 %v1291, %v1363
        %v1365 = vpop.f32.mrf.mxu0
        %1366 = vdwg.mxu0
        %1367 = vrot.lane.b32.xlu0 %v737, 112
        %v1368 = vpop.permute.xlu0 %1367
        %1369 = vrot.lane.b32.xlu0 %v813, 112
        %v1370 = vpop.permute.xlu0 %1369
        %v1371 = vsel %vm892, %v1368, 0
        %v1373 = vsel %vm892, %v1370, 0
        %1375 = vmatprep.subr.mxu0 0.0
        %1376 = vmatpush1.xpose.msra.mxu0 0.0
        %1377 = vmatprep.subr.mxu0 0.0
        %1378 = vmatpush1.xpose.msra.mxu0 0.0
        %1379 = vmatprep.subr.mxu0 0.0
        %1380 = vmatpush1.xpose.msra.mxu0 0.0
        %1381 = vmatprep.subr.mxu0 0.0
        %1382 = vmatpush1.xpose.msra.mxu0 0.0
        %1383 = vmatprep.subr.mxu0 0.0
        %1384 = vmatpush1.xpose.msra.mxu0 0.0
        %1385 = vmatprep.subr.mxu0 0.0
        %1386 = vmatpush1.xpose.msra.mxu0 0.0
        %1387 = vmatprep.subr.mxu0 0.0
        %1388 = vmatpush1.xpose.msra.mxu0 0.0
        %1389 = vmatprep.subr.mxu0 0.0
        %1390 = vmatpush1.xpose.msra.mxu0 0.0
        %1391 = vmatprep.subr.mxu0 0.0
        %1392 = vmatpush1.xpose.msra.mxu0 0.0
        %1393 = vmatprep.subr.mxu0 0.0
        %1394 = vmatpush1.xpose.msra.mxu0 0.0
        %1395 = vmatprep.subr.mxu0 0.0
        %1396 = vmatpush1.xpose.msra.mxu0 0.0
        %1397 = vmatprep.subr.mxu0 0.0
        %1398 = vmatpush1.xpose.msra.mxu0 0.0
        %1399 = vmatprep.subr.mxu0 0.0
        %1400 = vmatpush1.xpose.msra.mxu0 0.0
        %1401 = vmatprep.subr.mxu0 0.0
        %1402 = vmatpush1.xpose.msra.mxu0 0.0
        %1403 = vmatprep.subr.mxu0 0.0
        %1404 = vmatpush1.xpose.msra.mxu0 0.0
        %1405 = vmatprep.subr.mxu0 0.0
        %1406 = vmatpush1.xpose.msra.mxu0 %v1373
        %1407 = vmatprep.subr.mxu0 0.0
        %1408 = vmatpush2.xpose.msra.mxu0 0.0
        %1409 = vmatprep.subr.mxu0 0.0
        %1410 = vmatpush2.xpose.msra.mxu0 0.0
        %1411 = vmatprep.subr.mxu0 0.0
        %1412 = vmatpush2.xpose.msra.mxu0 0.0
        %1413 = vmatprep.subr.mxu0 0.0
        %1414 = vmatpush2.xpose.msra.mxu0 0.0
        %1415 = vmatprep.subr.mxu0 0.0
        %1416 = vmatpush2.xpose.msra.mxu0 0.0
        %1417 = vmatprep.subr.mxu0 0.0
        %1418 = vmatpush2.xpose.msra.mxu0 0.0
        %1419 = vmatprep.subr.mxu0 0.0
        %1420 = vmatpush2.xpose.msra.mxu0 0.0
        %1421 = vmatprep.subr.mxu0 0.0
        %1422 = vmatpush2.xpose.msra.mxu0 0.0
        %1423 = vmatprep.subr.mxu0 0.0
        %1424 = vmatpush2.xpose.msra.mxu0 0.0
        %1425 = vmatprep.subr.mxu0 0.0
        %1426 = vmatpush2.xpose.msra.mxu0 0.0
        %1427 = vmatprep.subr.mxu0 0.0
        %1428 = vmatpush2.xpose.msra.mxu0 0.0
        %1429 = vmatprep.subr.mxu0 0.0
        %1430 = vmatpush2.xpose.msra.mxu0 0.0
        %1431 = vmatprep.subr.mxu0 0.0
        %1432 = vmatpush2.xpose.msra.mxu0 0.0
        %1433 = vmatprep.subr.mxu0 0.0
        %1434 = vmatpush2.xpose.msra.mxu0 0.0
        %1435 = vmatprep.subr.mxu0 0.0
        %1436 = vmatpush2.xpose.msra.mxu0 0.0
        %1437 = vmatprep.subr.mxu0 0.0
        %1438 = vmatpush2.xpose.msra.mxu0 0.0
        %1439 = vmatprep.mubr.f32.mxu0 0.0
        %1440 = vmatmul.mubr.f32.gmra.mxu0 %v1371
        %v1441 = vpop.f32.mrf.mxu0
        %v1442 = vadd.f32 0.0, %v1441
        %v1443 = vpop.f32.mrf.mxu0
        %1444 = vdwg.mxu0
        %v1445 = vmul.f32 %v1442, 0.35355338
        %v1446 = vsel %vm892, %v1445, -inf
        %1447 = vmax.xlane.f32.xlu0 %v1446
        %v1448 = vpop.xlane.xlu0 %1447
        %v1449 = vsub.f32 %v1445, %v1448
        %v1450 = vmul.f32 %v1449, 1.442695
        %v1451 = vpow.pop %v1450
        %v1452 = vsel %vm892, %v1451, 0.0
        %1453 = vadd.xlane.f32.xlu0 %v1452
        %v1454 = vpop.xlane.xlu0 %1453
        %v1455 = vrcp.pop %v1454
        %v1456 = vmul.f32 %v1451, %v1455
        %1457 = vrot.lane.b32.xlu0 %v889, 112
        %v1458 = vpop.permute.xlu0 %1457
        %v1461 = vsel %vm892, %v1456, 0
        %1463 = vmatprep.subr.mxu0 0.0
        %1464 = vmatpush1.msra.mxu0 0.0
        %1465 = vmatprep.subr.mxu0 0.0
        %1466 = vmatpush1.msra.mxu0 0.0
        %1467 = vmatprep.subr.mxu0 0.0
        %1468 = vmatpush1.msra.mxu0 0.0
        %1469 = vmatprep.subr.mxu0 0.0
        %1470 = vmatpush1.msra.mxu0 0.0
        %1471 = vmatprep.subr.mxu0 0.0
        %1472 = vmatpush1.msra.mxu0 0.0
        %1473 = vmatprep.subr.mxu0 0.0
        %1474 = vmatpush1.msra.mxu0 0.0
        %1475 = vmatprep.subr.mxu0 0.0
        %1476 = vmatpush1.msra.mxu0 0.0
        %1477 = vmatprep.subr.mxu0 0.0
        %1478 = vmatpush1.msra.mxu0 0.0
        %1479 = vmatprep.subr.mxu0 0.0
        %1480 = vmatpush1.msra.mxu0 0.0
        %1481 = vmatprep.subr.mxu0 0.0
        %1482 = vmatpush1.msra.mxu0 0.0
        %1483 = vmatprep.subr.mxu0 0.0
        %1484 = vmatpush1.msra.mxu0 0.0
        %1485 = vmatprep.subr.mxu0 0.0
        %1486 = vmatpush1.msra.mxu0 0.0
        %1487 = vmatprep.subr.mxu0 0.0
        %1488 = vmatpush1.msra.mxu0 0.0
        %1489 = vmatprep.subr.mxu0 0.0
        %1490 = vmatpush1.msra.mxu0 0.0
        %1491 = vmatprep.subr.mxu0 0.0
        %1492 = vmatpush1.msra.mxu0 0.0
        %1493 = vmatprep.subr.mxu0 0.0
        %1494 = vmatpush1.msra.mxu0 %v1458
        %1495 = vmatprep.subr.mxu0 0.0
        %1496 = vmatpush2.msra.mxu0 0.0
        %1497 = vmatprep.subr.mxu0 0.0
        %1498 = vmatpush2.msra.mxu0 0.0
        %1499 = vmatprep.subr.mxu0 0.0
        %1500 = vmatpush2.msra.mxu0 0.0
        %1501 = vmatprep.subr.mxu0 0.0
        %1502 = vmatpush2.msra.mxu0 0.0
        %1503 = vmatprep.subr.mxu0 0.0
        %1504 = vmatpush2.msra.mxu0 0.0
        %1505 = vmatprep.subr.mxu0 0.0
        %1506 = vmatpush2.msra.mxu0 0.0
        %1507 = vmatprep.subr.mxu0 0.0
        %1508 = vmatpush2.msra.mxu0 0.0
        %1509 = vmatprep.subr.mxu0 0.0
        %1510 = vmatpush2.msra.mxu0 0.0
        %1511 = vmatprep.subr.mxu0 0.0
        %1512 = vmatpush2.msra.mxu0 0.0
        %1513 = vmatprep.subr.mxu0 0.0
        %1514 = vmatpush2.msra.mxu0 0.0
        %1515 = vmatprep.subr.mxu0 0.0
        %1516 = vmatpush2.msra.mxu0 0.0
        %1517 = vmatprep.subr.mxu0 0.0
        %1518 = vmatpush2.msra.mxu0 0.0
        %1519 = vmatprep.subr.mxu0 0.0
        %1520 = vmatpush2.msra.mxu0 0.0
        %1521 = vmatprep.subr.mxu0 0.0
        %1522 = vmatpush2.msra.mxu0 0.0
        %1523 = vmatprep.subr.mxu0 0.0
        %1524 = vmatpush2.msra.mxu0 0.0
        %1525 = vmatprep.subr.mxu0 0.0
        %1526 = vmatpush2.msra.mxu0 0.0
        %1527 = vmatprep.mubr.f32.mxu0 0.0
        %1528 = vmatmul.mubr.f32.gmra.mxu0 %v1461
        %v1529 = vpop.f32.mrf.mxu0
        %v1530 = vadd.f32 0.0, %v1529
        %v1531 = vpop.f32.mrf.mxu0
        %1532 = vdwg.mxu0
        %v1534 = vsel %vm892, %v1530, 0
        %1536 = vmatprep.subr.mxu0 0.0
        %1537 = vmatpush1.msra.mxu0 0.0
        %1538 = vmatprep.subr.mxu0 0.0
        %1539 = vmatpush1.msra.mxu0 0.0
        %1540 = vmatprep.subr.mxu0 0.0
        %1541 = vmatpush1.msra.mxu0 0.0
        %1542 = vmatprep.subr.mxu0 0.0
        %1543 = vmatpush1.msra.mxu0 0.0
        %1544 = vmatprep.subr.mxu0 0.0
        %1545 = vmatpush1.msra.mxu0 0.0
        %1546 = vmatprep.subr.mxu0 0.0
        %1547 = vmatpush1.msra.mxu0 0.0
        %1548 = vmatprep.subr.mxu0 0.0
        %1549 = vmatpush1.msra.mxu0 0.0
        %1550 = vmatprep.subr.mxu0 0.0
        %1551 = vmatpush1.msra.mxu0 0.0
        %1552 = vmatprep.subr.mxu0 0.0
        %1553 = vmatpush1.msra.mxu0 0.0
        %1554 = vmatprep.subr.mxu0 0.0
        %1555 = vmatpush1.msra.mxu0 0.0
        %1556 = vmatprep.subr.mxu0 0.0
        %1557 = vmatpush1.msra.mxu0 0.0
        %1558 = vmatprep.subr.mxu0 0.0
        %1559 = vmatpush1.msra.mxu0 0.0
        %1560 = vmatprep.subr.mxu0 0.0
        %1561 = vmatpush1.msra.mxu0 0.0
        %1562 = vmatprep.subr.mxu0 0.0
        %1563 = vmatpush1.msra.mxu0 0.0
        %1564 = vmatprep.subr.mxu0 0.0
        %1565 = vmatpush1.msra.mxu0 0.0
        %1566 = vmatprep.subr.mxu0 0.0
        %1567 = vmatpush1.msra.mxu0 %v614
        %1568 = vmatprep.subr.mxu0 0.0
        %1569 = vmatpush2.msra.mxu0 0.0
        %1570 = vmatprep.subr.mxu0 0.0
        %1571 = vmatpush2.msra.mxu0 0.0
        %1572 = vmatprep.subr.mxu0 0.0
        %1573 = vmatpush2.msra.mxu0 0.0
        %1574 = vmatprep.subr.mxu0 0.0
        %1575 = vmatpush2.msra.mxu0 0.0
        %1576 = vmatprep.subr.mxu0 0.0
        %1577 = vmatpush2.msra.mxu0 0.0
        %1578 = vmatprep.subr.mxu0 0.0
        %1579 = vmatpush2.msra.mxu0 0.0
        %1580 = vmatprep.subr.mxu0 0.0
        %1581 = vmatpush2.msra.mxu0 0.0
        %1582 = vmatprep.subr.mxu0 0.0
        %1583 = vmatpush2.msra.mxu0 0.0
        %1584 = vmatprep.subr.mxu0 0.0
        %1585 = vmatpush2.msra.mxu0 0.0
        %1586 = vmatprep.subr.mxu0 0.0
        %1587 = vmatpush2.msra.mxu0 0.0
        %1588 = vmatprep.subr.mxu0 0.0
        %1589 = vmatpush2.msra.mxu0 0.0
        %1590 = vmatprep.subr.mxu0 0.0
        %1591 = vmatpush2.msra.mxu0 0.0
        %1592 = vmatprep.subr.mxu0 0.0
        %1593 = vmatpush2.msra.mxu0 0.0
        %1594 = vmatprep.subr.mxu0 0.0
        %1595 = vmatpush2.msra.mxu0 0.0
        %1596 = vmatprep.subr.mxu0 0.0
        %1597 = vmatpush2.msra.mxu0 0.0
        %1598 = vmatprep.subr.mxu0 0.0
        %1599 = vmatpush2.msra.mxu0 0.0
        %1600 = vmatprep.mubr.f32.mxu0 0.0
        %1601 = vmatmul.mubr.f32.gmra.mxu0 %v1534
        %v1602 = vpop.f32.mrf.mxu0
        %v1603 = vadd.f32 0.0, %v1602
        %v1604 = vpop.f32.mrf.mxu0
        %1605 = vdwg.mxu0
        %v1606 = vadd.f32 %v1364, %v1603
        %1607 = vrot.lane.b32.xlu0 %v737, 104
        %v1608 = vpop.permute.xlu0 %1607
        %1609 = vrot.lane.b32.xlu0 %v813, 104
        %v1610 = vpop.permute.xlu0 %1609
        %v1611 = vsel %vm892, %v1608, 0
        %v1613 = vsel %vm892, %v1610, 0
        %1615 = vmatprep.subr.mxu0 0.0
        %1616 = vmatpush1.xpose.msra.mxu0 0.0
        %1617 = vmatprep.subr.mxu0 0.0
        %1618 = vmatpush1.xpose.msra.mxu0 0.0
        %1619 = vmatprep.subr.mxu0 0.0
        %1620 = vmatpush1.xpose.msra.mxu0 0.0
        %1621 = vmatprep.subr.mxu0 0.0
        %1622 = vmatpush1.xpose.msra.mxu0 0.0
        %1623 = vmatprep.subr.mxu0 0.0
        %1624 = vmatpush1.xpose.msra.mxu0 0.0
        %1625 = vmatprep.subr.mxu0 0.0
        %1626 = vmatpush1.xpose.msra.mxu0 0.0
        %1627 = vmatprep.subr.mxu0 0.0
        %1628 = vmatpush1.xpose.msra.mxu0 0.0
        %1629 = vmatprep.subr.mxu0 0.0
        %1630 = vmatpush1.xpose.msra.mxu0 0.0
        %1631 = vmatprep.subr.mxu0 0.0
        %1632 = vmatpush1.xpose.msra.mxu0 0.0
        %1633 = vmatprep.subr.mxu0 0.0
        %1634 = vmatpush1.xpose.msra.mxu0 0.0
        %1635 = vmatprep.subr.mxu0 0.0
        %1636 = vmatpush1.xpose.msra.mxu0 0.0
        %1637 = vmatprep.subr.mxu0 0.0
        %1638 = vmatpush1.xpose.msra.mxu0 0.0
        %1639 = vmatprep.subr.mxu0 0.0
        %1640 = vmatpush1.xpose.msra.mxu0 0.0
        %1641 = vmatprep.subr.mxu0 0.0
        %1642 = vmatpush1.xpose.msra.mxu0 0.0
        %1643 = vmatprep.subr.mxu0 0.0
        %1644 = vmatpush1.xpose.msra.mxu0 0.0
        %1645 = vmatprep.subr.mxu0 0.0
        %1646 = vmatpush1.xpose.msra.mxu0 %v1613
        %1647 = vmatprep.subr.mxu0 0.0
        %1648 = vmatpush2.xpose.msra.mxu0 0.0
        %1649 = vmatprep.subr.mxu0 0.0
        %1650 = vmatpush2.xpose.msra.mxu0 0.0
        %1651 = vmatprep.subr.mxu0 0.0
        %1652 = vmatpush2.xpose.msra.mxu0 0.0
        %1653 = vmatprep.subr.mxu0 0.0
        %1654 = vmatpush2.xpose.msra.mxu0 0.0
        %1655 = vmatprep.subr.mxu0 0.0
        %1656 = vmatpush2.xpose.msra.mxu0 0.0
        %1657 = vmatprep.subr.mxu0 0.0
        %1658 = vmatpush2.xpose.msra.mxu0 0.0
        %1659 = vmatprep.subr.mxu0 0.0
        %1660 = vmatpush2.xpose.msra.mxu0 0.0
        %1661 = vmatprep.subr.mxu0 0.0
        %1662 = vmatpush2.xpose.msra.mxu0 0.0
        %1663 = vmatprep.subr.mxu0 0.0
        %1664 = vmatpush2.xpose.msra.mxu0 0.0
        %1665 = vmatprep.subr.mxu0 0.0
        %1666 = vmatpush2.xpose.msra.mxu0 0.0
        %1667 = vmatprep.subr.mxu0 0.0
        %1668 = vmatpush2.xpose.msra.mxu0 0.0
        %1669 = vmatprep.subr.mxu0 0.0
        %1670 = vmatpush2.xpose.msra.mxu0 0.0
        %1671 = vmatprep.subr.mxu0 0.0
        %1672 = vmatpush2.xpose.msra.mxu0 0.0
        %1673 = vmatprep.subr.mxu0 0.0
        %1674 = vmatpush2.xpose.msra.mxu0 0.0
        %1675 = vmatprep.subr.mxu0 0.0
        %1676 = vmatpush2.xpose.msra.mxu0 0.0
        %1677 = vmatprep.subr.mxu0 0.0
        %1678 = vmatpush2.xpose.msra.mxu0 0.0
        %1679 = vmatprep.mubr.f32.mxu0 0.0
        %1680 = vmatmul.mubr.f32.gmra.mxu0 %v1611
        %v1681 = vpop.f32.mrf.mxu0
        %v1682 = vadd.f32 0.0, %v1681
        %v1683 = vpop.f32.mrf.mxu0
        %1684 = vdwg.mxu0
        %v1685 = vmul.f32 %v1682, 0.35355338
        %v1686 = vsel %vm892, %v1685, -inf
        %1687 = vmax.xlane.f32.xlu0 %v1686
        %v1688 = vpop.xlane.xlu0 %1687
        %v1689 = vsub.f32 %v1685, %v1688
        %v1690 = vmul.f32 %v1689, 1.442695
        %v1691 = vpow.pop %v1690
        %v1692 = vsel %vm892, %v1691, 0.0
        %1693 = vadd.xlane.f32.xlu0 %v1692
        %v1694 = vpop.xlane.xlu0 %1693
        %v1695 = vrcp.pop %v1694
        %v1696 = vmul.f32 %v1691, %v1695
        %1697 = vrot.lane.b32.xlu0 %v889, 104
        %v1698 = vpop.permute.xlu0 %1697
        %v1701 = vsel %vm892, %v1696, 0
        %1703 = vmatprep.subr.mxu0 0.0
        %1704 = vmatpush1.msra.mxu0 0.0
        %1705 = vmatprep.subr.mxu0 0.0
        %1706 = vmatpush1.msra.mxu0 0.0
        %1707 = vmatprep.subr.mxu0 0.0
        %1708 = vmatpush1.msra.mxu0 0.0
        %1709 = vmatprep.subr.mxu0 0.0
        %1710 = vmatpush1.msra.mxu0 0.0
        %1711 = vmatprep.subr.mxu0 0.0
        %1712 = vmatpush1.msra.mxu0 0.0
        %1713 = vmatprep.subr.mxu0 0.0
        %1714 = vmatpush1.msra.mxu0 0.0
        %1715 = vmatprep.subr.mxu0 0.0
        %1716 = vmatpush1.msra.mxu0 0.0
        %1717 = vmatprep.subr.mxu0 0.0
        %1718 = vmatpush1.msra.mxu0 0.0
        %1719 = vmatprep.subr.mxu0 0.0
        %1720 = vmatpush1.msra.mxu0 0.0
        %1721 = vmatprep.subr.mxu0 0.0
        %1722 = vmatpush1.msra.mxu0 0.0
        %1723 = vmatprep.subr.mxu0 0.0
        %1724 = vmatpush1.msra.mxu0 0.0
        %1725 = vmatprep.subr.mxu0 0.0
        %1726 = vmatpush1.msra.mxu0 0.0
        %1727 = vmatprep.subr.mxu0 0.0
        %1728 = vmatpush1.msra.mxu0 0.0
        %1729 = vmatprep.subr.mxu0 0.0
        %1730 = vmatpush1.msra.mxu0 0.0
        %1731 = vmatprep.subr.mxu0 0.0
        %1732 = vmatpush1.msra.mxu0 0.0
        %1733 = vmatprep.subr.mxu0 0.0
        %1734 = vmatpush1.msra.mxu0 %v1698
        %1735 = vmatprep.subr.mxu0 0.0
        %1736 = vmatpush2.msra.mxu0 0.0
        %1737 = vmatprep.subr.mxu0 0.0
        %1738 = vmatpush2.msra.mxu0 0.0
        %1739 = vmatprep.subr.mxu0 0.0
        %1740 = vmatpush2.msra.mxu0 0.0
        %1741 = vmatprep.subr.mxu0 0.0
        %1742 = vmatpush2.msra.mxu0 0.0
        %1743 = vmatprep.subr.mxu0 0.0
        %1744 = vmatpush2.msra.mxu0 0.0
        %1745 = vmatprep.subr.mxu0 0.0
        %1746 = vmatpush2.msra.mxu0 0.0
        %1747 = vmatprep.subr.mxu0 0.0
        %1748 = vmatpush2.msra.mxu0 0.0
        %1749 = vmatprep.subr.mxu0 0.0
        %1750 = vmatpush2.msra.mxu0 0.0
        %1751 = vmatprep.subr.mxu0 0.0
        %1752 = vmatpush2.msra.mxu0 0.0
        %1753 = vmatprep.subr.mxu0 0.0
        %1754 = vmatpush2.msra.mxu0 0.0
        %1755 = vmatprep.subr.mxu0 0.0
        %1756 = vmatpush2.msra.mxu0 0.0
        %1757 = vmatprep.subr.mxu0 0.0
        %1758 = vmatpush2.msra.mxu0 0.0
        %1759 = vmatprep.subr.mxu0 0.0
        %1760 = vmatpush2.msra.mxu0 0.0
        %1761 = vmatprep.subr.mxu0 0.0
        %1762 = vmatpush2.msra.mxu0 0.0
        %1763 = vmatprep.subr.mxu0 0.0
        %1764 = vmatpush2.msra.mxu0 0.0
        %1765 = vmatprep.subr.mxu0 0.0
        %1766 = vmatpush2.msra.mxu0 0.0
        %1767 = vmatprep.mubr.f32.mxu0 0.0
        %1768 = vmatmul.mubr.f32.gmra.mxu0 %v1701
        %v1769 = vpop.f32.mrf.mxu0
        %v1770 = vadd.f32 0.0, %v1769
        %v1771 = vpop.f32.mrf.mxu0
        %1772 = vdwg.mxu0
        %v1774 = vsel %vm892, %v1770, 0
        %1776 = vmatprep.subr.mxu0 0.0
        %1777 = vmatpush1.msra.mxu0 0.0
        %1778 = vmatprep.subr.mxu0 0.0
        %1779 = vmatpush1.msra.mxu0 0.0
        %1780 = vmatprep.subr.mxu0 0.0
        %1781 = vmatpush1.msra.mxu0 0.0
        %1782 = vmatprep.subr.mxu0 0.0
        %1783 = vmatpush1.msra.mxu0 0.0
        %1784 = vmatprep.subr.mxu0 0.0
        %1785 = vmatpush1.msra.mxu0 0.0
        %1786 = vmatprep.subr.mxu0 0.0
        %1787 = vmatpush1.msra.mxu0 0.0
        %1788 = vmatprep.subr.mxu0 0.0
        %1789 = vmatpush1.msra.mxu0 0.0
        %1790 = vmatprep.subr.mxu0 0.0
        %1791 = vmatpush1.msra.mxu0 0.0
        %1792 = vmatprep.subr.mxu0 0.0
        %1793 = vmatpush1.msra.mxu0 0.0
        %1794 = vmatprep.subr.mxu0 0.0
        %1795 = vmatpush1.msra.mxu0 0.0
        %1796 = vmatprep.subr.mxu0 0.0
        %1797 = vmatpush1.msra.mxu0 0.0
        %1798 = vmatprep.subr.mxu0 0.0
        %1799 = vmatpush1.msra.mxu0 0.0
        %1800 = vmatprep.subr.mxu0 0.0
        %1801 = vmatpush1.msra.mxu0 0.0
        %1802 = vmatprep.subr.mxu0 0.0
        %1803 = vmatpush1.msra.mxu0 0.0
        %1804 = vmatprep.subr.mxu0 0.0
        %1805 = vmatpush1.msra.mxu0 0.0
        %1806 = vmatprep.subr.mxu0 0.0
        %1807 = vmatpush1.msra.mxu0 %v615
        %1808 = vmatprep.subr.mxu0 0.0
        %1809 = vmatpush2.msra.mxu0 0.0
        %1810 = vmatprep.subr.mxu0 0.0
        %1811 = vmatpush2.msra.mxu0 0.0
        %1812 = vmatprep.subr.mxu0 0.0
        %1813 = vmatpush2.msra.mxu0 0.0
        %1814 = vmatprep.subr.mxu0 0.0
        %1815 = vmatpush2.msra.mxu0 0.0
        %1816 = vmatprep.subr.mxu0 0.0
        %1817 = vmatpush2.msra.mxu0 0.0
        %1818 = vmatprep.subr.mxu0 0.0
        %1819 = vmatpush2.msra.mxu0 0.0
        %1820 = vmatprep.subr.mxu0 0.0
        %1821 = vmatpush2.msra.mxu0 0.0
        %1822 = vmatprep.subr.mxu0 0.0
        %1823 = vmatpush2.msra.mxu0 0.0
        %1824 = vmatprep.subr.mxu0 0.0
        %1825 = vmatpush2.msra.mxu0 0.0
        %1826 = vmatprep.subr.mxu0 0.0
        %1827 = vmatpush2.msra.mxu0 0.0
        %1828 = vmatprep.subr.mxu0 0.0
        %1829 = vmatpush2.msra.mxu0 0.0
        %1830 = vmatprep.subr.mxu0 0.0
        %1831 = vmatpush2.msra.mxu0 0.0
        %1832 = vmatprep.subr.mxu0 0.0
        %1833 = vmatpush2.msra.mxu0 0.0
        %1834 = vmatprep.subr.mxu0 0.0
        %1835 = vmatpush2.msra.mxu0 0.0
        %1836 = vmatprep.subr.mxu0 0.0
        %1837 = vmatpush2.msra.mxu0 0.0
        %1838 = vmatprep.subr.mxu0 0.0
        %1839 = vmatpush2.msra.mxu0 0.0
        %1840 = vmatprep.mubr.f32.mxu0 0.0
        %1841 = vmatmul.mubr.f32.gmra.mxu0 %v1774
        %v1842 = vpop.f32.mrf.mxu0
        %v1843 = vadd.f32 0.0, %v1842
        %v1844 = vpop.f32.mrf.mxu0
        %1845 = vdwg.mxu0
        %v1846 = vadd.f32 %v1606, %v1843
        %v1848 = vlaneseq
        %v1849 = vshrl.u32 %v1848, 7
        %v1850 = vsub.s32 0, %v1849
        %v1851 = vrot.slane %v616, %v1850
        %v1853 = vadd.f32 %v1846, %v1851
        %v1854 = vadd.f32 %v631, %v1853
        %v1855 = vsel %vm632, %v1854, 0.0
        %1856 = vadd.xlane.f32.xlu0 %v1855
        %v1857 = vpop.xlane.xlu0 %1856
        %v1858 = vmul.f32 %v1857, %v636
        %v1859 = vsub.f32 %v1854, %v1858
        %v1860 = vmul.f32 %v1859, %v1859
        %v1861 = vsel %vm632, %v1860, 0.0
        %1862 = vadd.xlane.f32.xlu0 %v1861
        %v1863 = vpop.xlane.xlu0 %1862
        %v1864 = vmul.f32 %v1863, %v636
        %v1865 = vadd.f32 %v1864, 1e-05
        %v1866 = vrsqrt.pop %v1865
        %v1867 = vmul.f32 %v1859, %v1866
        %v1869 = vlaneseq
        %v1870 = vshrl.u32 %v1869, 7
        %v1871 = vsub.s32 0, %v1870
        %v1872 = vrot.slane %v595, %v1871
        %v1874 = vmul.f32 %v1867, %v1872
        %v1876 = vlaneseq
        %v1877 = vshrl.u32 %v1876, 7
        %v1878 = vsub.s32 0, %v1877
        %v1879 = vrot.slane %v596, %v1878
        %v1881 = vadd.f32 %v1874, %v1879
        %v1883 = vlaneseq
        %v1884 = vshrl.u32 %v1883, 7
        %v1885 = vsub.s32 0, %v1884
        %v1886 = vrot.slane %v621, %v1885
        %v1889 = vsel %vm632, %v1881, 0
        %1891 = vmatprep.subr.mxu0 0.0
        %1892 = vmatpush1.msra.mxu0 0.0
        %1893 = vmatprep.subr.mxu0 0.0
        %1894 = vmatpush1.msra.mxu0 0.0
        %1895 = vmatprep.subr.mxu0 0.0
        %1896 = vmatpush1.msra.mxu0 0.0
        %1897 = vmatprep.subr.mxu0 0.0
        %1898 = vmatpush1.msra.mxu0 0.0
        %1899 = vmatprep.subr.mxu0 0.0
        %1900 = vmatpush1.msra.mxu0 0.0
        %1901 = vmatprep.subr.mxu0 0.0
        %1902 = vmatpush1.msra.mxu0 0.0
        %1903 = vmatprep.subr.mxu0 0.0
        %1904 = vmatpush1.msra.mxu0 0.0
        %1905 = vmatprep.subr.mxu0 0.0
        %1906 = vmatpush1.msra.mxu0 0.0
        %1907 = vmatprep.subr.mxu0 0.0
        %1908 = vmatpush1.msra.mxu0 0.0
        %1909 = vmatprep.subr.mxu0 0.0
        %1910 = vmatpush1.msra.mxu0 0.0
        %1911 = vmatprep.subr.mxu0 0.0
        %1912 = vmatpush1.msra.mxu0 0.0
        %1913 = vmatprep.subr.mxu0 0.0
        %1914 = vmatpush1.msra.mxu0 0.0
        %1915 = vmatprep.subr.mxu0 0.0
        %1916 = vmatpush1.msra.mxu0 %v620
        %1917 = vmatprep.subr.mxu0 0.0
        %1918 = vmatpush1.msra.mxu0 %v619
        %1919 = vmatprep.subr.mxu0 0.0
        %1920 = vmatpush1.msra.mxu0 %v618
        %1921 = vmatprep.subr.mxu0 0.0
        %1922 = vmatpush1.msra.mxu0 %v617
        %1923 = vmatprep.subr.mxu0 0.0
        %1924 = vmatpush2.msra.mxu0 0.0
        %1925 = vmatprep.subr.mxu0 0.0
        %1926 = vmatpush2.msra.mxu0 0.0
        %1927 = vmatprep.subr.mxu0 0.0
        %1928 = vmatpush2.msra.mxu0 0.0
        %1929 = vmatprep.subr.mxu0 0.0
        %1930 = vmatpush2.msra.mxu0 0.0
        %1931 = vmatprep.subr.mxu0 0.0
        %1932 = vmatpush2.msra.mxu0 0.0
        %1933 = vmatprep.subr.mxu0 0.0
        %1934 = vmatpush2.msra.mxu0 0.0
        %1935 = vmatprep.subr.mxu0 0.0
        %1936 = vmatpush2.msra.mxu0 0.0
        %1937 = vmatprep.subr.mxu0 0.0
        %1938 = vmatpush2.msra.mxu0 0.0
        %1939 = vmatprep.subr.mxu0 0.0
        %1940 = vmatpush2.msra.mxu0 0.0
        %1941 = vmatprep.subr.mxu0 0.0
        %1942 = vmatpush2.msra.mxu0 0.0
        %1943 = vmatprep.subr.mxu0 0.0
        %1944 = vmatpush2.msra.mxu0 0.0
        %1945 = vmatprep.subr.mxu0 0.0
        %1946 = vmatpush2.msra.mxu0 0.0
        %1947 = vmatprep.subr.mxu0 0.0
        %1948 = vmatpush2.msra.mxu0 0.0
        %1949 = vmatprep.subr.mxu0 0.0
        %1950 = vmatpush2.msra.mxu0 0.0
        %1951 = vmatprep.subr.mxu0 0.0
        %1952 = vmatpush2.msra.mxu0 0.0
        %1953 = vmatprep.subr.mxu0 0.0
        %1954 = vmatpush2.msra.mxu0 0.0
        %1955 = vmatprep.mubr.f32.mxu0 0.0
        %1956 = vmatmul.mubr.f32.gmra.mxu0 %v1889
        %v1957 = vpop.f32.mrf.mxu0
        %v1958 = vadd.f32 %v1886, %v1957
        %v1959 = vpop.f32.mrf.mxu0
        %1960 = vdwg.mxu0
        %v1961 = vmul.f32 %v1958, 0.5
        %v1962 = vmul.f32 %v1958, 0.044715
        %v1963 = vmul.f32 %v1962, %v1958
        %v1964 = vmul.f32 %v1963, %v1958
        %v1965 = vadd.f32 %v1958, %v1964
        %v1966 = vmul.f32 %v1965, 0.7978846
        %v1967 = vtanh.pop %v1966
        %v1968 = vadd.f32 %v1967, 1.0
        %v1969 = vmul.f32 %v1961, %v1968
        %v1971 = vlaneseq
        %v1972 = vshrl.u32 %v1971, 7
        %v1973 = vsub.s32 0, %v1972
        %v1974 = vrot.slane %v630, %v1973
        %vm1976 = vcmask 523264
        %v1978 = vsel %vm1976, %v1969, 0
        %1980 = vmatprep.subr.mxu0 0.0
        %1981 = vmatpush1.msra.mxu0 0.0
        %1982 = vmatprep.subr.mxu0 0.0
        %1983 = vmatpush1.msra.mxu0 0.0
        %1984 = vmatprep.subr.mxu0 0.0
        %1985 = vmatpush1.msra.mxu0 0.0
        %1986 = vmatprep.subr.mxu0 0.0
        %1987 = vmatpush1.msra.mxu0 0.0
        %1988 = vmatprep.subr.mxu0 0.0
        %1989 = vmatpush1.msra.mxu0 0.0
        %1990 = vmatprep.subr.mxu0 0.0
        %1991 = vmatpush1.msra.mxu0 0.0
        %1992 = vmatprep.subr.mxu0 0.0
        %1993 = vmatpush1.msra.mxu0 0.0
        %1994 = vmatprep.subr.mxu0 0.0
        %1995 = vmatpush1.msra.mxu0 0.0
        %1996 = vmatprep.subr.mxu0 0.0
        %1997 = vmatpush1.msra.mxu0 %v629
        %1998 = vmatprep.subr.mxu0 0.0
        %1999 = vmatpush1.msra.mxu0 %v628
        %2000 = vmatprep.subr.mxu0 0.0
        %2001 = vmatpush1.msra.mxu0 %v627
        %2002 = vmatprep.subr.mxu0 0.0
        %2003 = vmatpush1.msra.mxu0 %v626
        %2004 = vmatprep.subr.mxu0 0.0
        %2005 = vmatpush1.msra.mxu0 %v625
        %2006 = vmatprep.subr.mxu0 0.0
        %2007 = vmatpush1.msra.mxu0 %v624
        %2008 = vmatprep.subr.mxu0 0.0
        %2009 = vmatpush1.msra.mxu0 %v623
        %2010 = vmatprep.subr.mxu0 0.0
        %2011 = vmatpush1.msra.mxu0 %v622
        %2012 = vmatprep.subr.mxu0 0.0
        %2013 = vmatpush2.msra.mxu0 0.0
        %2014 = vmatprep.subr.mxu0 0.0
        %2015 = vmatpush2.msra.mxu0 0.0
        %2016 = vmatprep.subr.mxu0 0.0
        %2017 = vmatpush2.msra.mxu0 0.0
        %2018 = vmatprep.subr.mxu0 0.0
        %2019 = vmatpush2.msra.mxu0 0.0
        %2020 = vmatprep.subr.mxu0 0.0
        %2021 = vmatpush2.msra.mxu0 0.0
        %2022 = vmatprep.subr.mxu0 0.0
        %2023 = vmatpush2.msra.mxu0 0.0
        %2024 = vmatprep.subr.mxu0 0.0
        %2025 = vmatpush2.msra.mxu0 0.0
        %2026 = vmatprep.subr.mxu0 0.0
        %2027 = vmatpush2.msra.mxu0 0.0
        %2028 = vmatprep.subr.mxu0 0.0
        %2029 = vmatpush2.msra.mxu0 0.0
        %2030 = vmatprep.subr.mxu0 0.0
        %2031 = vmatpush2.msra.mxu0 0.0
        %2032 = vmatprep.subr.mxu0 0.0
        %2033 = vmatpush2.msra.mxu0 0.0
        %2034 = vmatprep.subr.mxu0 0.0
        %2035 = vmatpush2.msra.mxu0 0.0
        %2036 = vmatprep.subr.mxu0 0.0
        %2037 = vmatpush2.msra.mxu0 0.0
        %2038 = vmatprep.subr.mxu0 0.0
        %2039 = vmatpush2.msra.mxu0 0.0
        %2040 = vmatprep.subr.mxu0 0.0
        %2041 = vmatpush2.msra.mxu0 0.0
        %2042 = vmatprep.subr.mxu0 0.0
        %2043 = vmatpush2.msra.mxu0 0.0
        %2044 = vmatprep.mubr.f32.mxu0 0.0
        %2045 = vmatmul.mubr.f32.gmra.mxu0 %v1978
        %v2046 = vpop.f32.mrf.mxu0
        %v2047 = vadd.f32 %v1974, %v2046
        %v2048 = vpop.f32.mrf.mxu0
        %2049 = vdwg.mxu0
        %v2050 = vadd.f32 %v1854, %v2047
        %2051 = vst.msk [vmem:[%s592] sm:$0xff] %vm632, %v2050
        %s2052 = sand.u32 %s405, 1
        %s2053 = scalar_lea.sflag [#allocation4], %s2052
        %s2054 = sand.u32 %s405, 1
        %s2055 = smul.addr %s2054, 8
        %s2056 = scalar_lea.vmem [#allocation8], %s2055
        // Predicated region
        $region101: #{tpu_custom_call.1} parent=87 // pred_check
          %p2057 = pneg %p415
        $region102: #{tpu_custom_call.1} parent=87 // pred_check_branch
          %2059 = sbr.rel (%p2057) target = $region104
        $region103: #{tpu_custom_call.1} parent=87 // pred_region
          %s2061 = ssub.s32 128, 128
          %2062 = vsyncadd %s2053, %s2061
          %s2063 = smul.addr %s35, 128
          %s2064 = scalar_lea.hbm %s17, %s2063
          %s2066 = sshll.u32 %s2056, 4
          %s2067 = int_to_ptr.vmem [resolvable:$true] %s2066
          %2069 = dma.vmem_to_hbm [thread:$0]  %s2067, 128, %s2064, %s2053
        $region104: #{tpu_custom_call.1} parent=87 // pred_fallthru
          _
      $region88: #{tpu_custom_call.1} parent=5 // pred_fallthru
        _
      %p2070 = scmp.le.s32.totalorder 2, %s30
      // Predicated region
      $region105: #{tpu_custom_call.1} parent=5 // pred_check
        %p2071 = pneg %p2070
      $region106: #{tpu_custom_call.1} parent=5 // pred_check_branch
        %2073 = sbr.rel (%p2071) target = $region108
      $region107: #{tpu_custom_call.1} parent=5 // pred_region
        %s2074 = ssub.s32 %s30, 2
        // Predicated region
        $region109: #{tpu_custom_call.1} parent=107 // pred_check
          %p2075 = pneg %p421
        $region110: #{tpu_custom_call.1} parent=107 // pred_check_branch
          %2077 = sbr.rel (%p2075) target = $region112
        $region111: #{tpu_custom_call.1} parent=107 // pred_region
          %s2078 = sand.u32 %s406, 1
          %s2079 = scalar_lea.sflag [#allocation4], %s2078
          %s2080 = sand.u32 %s406, 1
          %s2081 = smul.addr %s2080, 8
          %s2082 = scalar_lea.vmem [#allocation8], %s2081
          %2083 = dma.done %s2079, 128
        $region112: #{tpu_custom_call.1} parent=107 // pred_fallthru
          _
      $region108: #{tpu_custom_call.1} parent=5 // pred_fallthru
        _
    $region6: #{tpu_custom_call.1} parent=1 // loop_footer
      %s34 = sadd.s32 1, %s30
    $region7: #{tpu_custom_call.1} parent=1 // loop_footer_branch
      %29 = sbr.rel target = $region3
    $region8: #{tpu_custom_call.1} parent=1 // loop_exit
      _
    %2084 = vsyncpa [#allocation3], 1
    %s2085 = scalar_lea.sflag [#allocation3], 1
    %2086 = vsyncpa %s2085, 1
    %2087 = vsyncpa [#allocation6], 1
    %2088 = vsyncpa [#allocation4], 1
    %s2089 = scalar_lea.sflag [#allocation4], 1
    %2090 = vsyncpa %s2089, 1

</llo_original>
